<compile_context>
chip_gen: v6e
topology: v6e:2x2x1
jax: 0.10.0
libtpu: 0.0.40
codegen_flags: <defaults>
</compile_context>

<pallas_src>
import jax
import jax.numpy as jnp
import numpy as np
from jax.experimental import pallas as pl
from jax.experimental.pallas import tpu as pltpu

E_CHAR = 50       # fixed by the module (self.e_char = 50)
E_CHAR_PAD = 64   # char-embedding lanes padded for aligned windows / DMA
KERNEL = 5        # standard CS224n CNN kernel width
CHUNK = 128       # word rows per inner chunk (bounds the vreg-resident working set)


def char_cnn_highway_kernel(emb_ref, wc_ref, bc_ref, whw_ref, bhw_ref, o_ref):
    """One word tile.
       emb_ref : (tn, M*E_CHAR_PAD) bf16    word-major, flattened (time, char) embeddings
       wc_ref  : (K*E_CHAR_PAD, EPAD) bf16  conv taps flattened along the contraction dim
       bc_ref  : (1, EPAD) f32
       whw_ref : (EPAD, 2*EPAD) bf16        [W_proj | W_gate], (in, out) layout
       bhw_ref : (1, 2*EPAD) f32
       o_ref   : (tn, EPAD) bf16
    """
    tn, mf = emb_ref.shape
    kc, epad = wc_ref.shape
    t_steps = mf // E_CHAR_PAD - kc // E_CHAR_PAD + 1        # T = M - K + 1 (static)

    for c0 in range(0, tn, CHUNK):                           # static unroll over word chunks
        nrows = min(CHUNK, tn - c0)
        rows = pl.ds(c0, nrows)

        # Conv1d as one contraction-(K*64) matmul per time step; running max stays in vregs.
        pooled = None
        for t in range(t_steps):                             # static unroll (T is small)
            lhs = emb_ref[rows, pl.ds(t * E_CHAR_PAD, kc)]   # (nrows, kc) bf16, read per step
            conv = jnp.dot(lhs, wc_ref[...], preferred_element_type=jnp.float32)
            pooled = conv if pooled is None else jnp.maximum(pooled, conv)

        # bias + ReLU hoisted past the time-max (bias time-invariant, ReLU monotone -> exact)
        pooled = jax.nn.relu(pooled + bc_ref[...])           # (nrows, epad) f32

        # Fused Highway: one (nrows, epad) x (epad, 2*epad) bf16 matmul, f32 accumulation.
        hw = jnp.dot(pooled.astype(jnp.bfloat16), whw_ref[...],
                     preferred_element_type=jnp.float32) + bhw_ref[...]
        proj = jax.nn.relu(hw[:, :epad])
        gate = jax.nn.sigmoid(hw[:, epad:])
        o_ref[rows, :] = (gate * proj + (1.0 - gate) * pooled).astype(o_ref.dtype)


def _round_up(a, b):
    return (a + b - 1) // b * b


def model_embeddings_forward(input_ids, params, *, tn=256):
    """input_ids: (L, B, M) int32 character indices -> (L, B, e_word) float32."""
    emb_table = params["embedding"]                 # (V, E_CHAR), pad row zeroed
    w_conv = params["w_conv"]                       # (e_word, E_CHAR, K)  torch Conv1d layout
    b_conv = params["b_conv"]                       # (e_word,)
    w_proj, b_proj = params["w_proj"], params["b_proj"]   # torch Linear (out, in)
    w_gate, b_gate = params["w_gate"], params["b_gate"]

    L, B, M = input_ids.shape
    e_word = w_conv.shape[0]
    K = w_conv.shape[2]
    T = M - K + 1
    assert T >= 1, "max_word_length must be >= kernel width"
    assert emb_table.shape[1] == E_CHAR
    N = L * B
    EPAD = ((e_word + 127) // 128) * 128            # lane-dense output / weight N dim
    KC = K * E_CHAR_PAD                             # conv contraction dim (320)
    MF = M * E_CHAR_PAD                             # flattened (time, char) row length

    # ---- pick the word-tile size ------------------------------------------------------
    tn = max(16, min(tn, _round_up(N, 16)))         # don't over-pad tiny inputs
    if tn > CHUNK:
        tn = _round_up(tn, CHUNK)                   # uniform 128-row chunks inside the tile
    Np = _round_up(N, tn)
    if Np // tn < 2 and N > CHUNK:                  # keep >=2 grid steps (both v7x TCs busy)
        tn = max(CHUNK, _round_up(pl.cdiv(N, 2), CHUNK))
        Np = _round_up(N, tn)

    # ---- glue: pad char dim 50->64, embedding lookup, flatten (word, time*char) --------
    table = jnp.pad(emb_table, ((0, 0), (0, E_CHAR_PAD - E_CHAR))).astype(jnp.bfloat16)
    ids = input_ids.reshape(N, M)
    ids = jnp.pad(ids, ((0, Np - N), (0, 0)))                        # padded words -> id 0
    emb = jnp.take(table, ids, axis=0).reshape(Np, MF)               # (Np, M*64) bf16

    # ---- weight prep: conv taps flattened over (tap, char); fused highway proj|gate ----
    wc = jnp.transpose(w_conv, (2, 1, 0))                            # (K, E_CHAR, e_word)
    wc = jnp.pad(wc, ((0, 0), (0, E_CHAR_PAD - E_CHAR), (0, EPAD - e_word)))
    wc = wc.reshape(KC, EPAD).astype(jnp.bfloat16)                   # (320, EPAD)
    bc = jnp.pad(b_conv, (0, EPAD - e_word)).reshape(1, EPAD).astype(jnp.float32)
    wp = jnp.pad(w_proj.T, ((0, EPAD - e_word), (0, EPAD - e_word)))
    wg = jnp.pad(w_gate.T, ((0, EPAD - e_word), (0, EPAD - e_word)))
    whw = jnp.concatenate([wp, wg], axis=1).astype(jnp.bfloat16)     # (EPAD, 2*EPAD) bf16
    bp = jnp.pad(b_proj, (0, EPAD - e_word))
    bg = jnp.pad(b_gate, (0, EPAD - e_word))
    bhw = jnp.concatenate([bp, bg]).reshape(1, 2 * EPAD).astype(jnp.float32)

    cost = pl.CostEstimate(
        flops=2 * Np * T * KC * EPAD + 2 * Np * EPAD * (2 * EPAD),
        transcendentals=Np * EPAD,                                   # sigmoid
        bytes_accessed=(Np * MF * 2 + KC * EPAD * 2
                        + EPAD * 2 * EPAD * 2 + Np * EPAD * 2),
    )

    # ---- Pallas kernel over word tiles --------------------------------------------------
    out = pl.pallas_call(
        char_cnn_highway_kernel,
        out_shape=jax.ShapeDtypeStruct((Np, EPAD), jnp.bfloat16),
        grid_spec=pltpu.PrefetchScalarGridSpec(
            num_scalar_prefetch=0,
            grid=(Np // tn,),
            in_specs=[
                pl.BlockSpec((tn, MF), lambda i: (i, 0)),
                # constant index_map -> weights DMA'd once, resident across the grid
                pl.BlockSpec((KC, EPAD), lambda i: (0, 0)),
                pl.BlockSpec((1, EPAD), lambda i: (0, 0)),
                pl.BlockSpec((EPAD, 2 * EPAD), lambda i: (0, 0)),
                pl.BlockSpec((1, 2 * EPAD), lambda i: (0, 0)),
            ],
            out_specs=pl.BlockSpec((tn, EPAD), lambda i: (i, 0)),
        ),
        compiler_params=pltpu.CompilerParams(dimension_semantics=("parallel",)),
        cost_estimate=cost,
    )(emb, wc, bc, whw, bhw)

    # Dropout: identity at inference.
    # TODO(synk): training-mode dropout (p=0.3) mask not implemented (would use pltpu PRNG).
    return out[:N, :e_word].astype(jnp.float32).reshape(L, B, e_word)


# ---- pure-JAX reference (mirrors the PyTorch forward exactly, eval mode, f32) ----------
def reference_forward(input_ids, params):
    emb = jnp.take(params["embedding"], input_ids, axis=0)              # (L, B, M, E_CHAR)
    x = jnp.transpose(emb, (0, 1, 3, 2)).astype(jnp.float32)            # (L, B, E_CHAR, M)
    W = params["w_conv"].astype(jnp.float32)
    b = params["b_conv"].astype(jnp.float32)
    e_word, _, K = W.shape
    T = x.shape[-1] - K + 1
    conv = jnp.stack(
        [jnp.einsum("lbck,ock->lbo", x[:, :, :, t:t + K], W) for t in range(T)], axis=-1
    ) + b[None, None, :, None]                                          # (L, B, e_word, T)
    pooled = jnp.max(jax.nn.relu(conv), axis=-1)                        # (L, B, e_word)
    proj = jax.nn.relu(pooled @ params["w_proj"].T + params["b_proj"])
    gate = jax.nn.sigmoid(pooled @ params["w_gate"].T + params["b_gate"])
    return gate * proj + (1.0 - gate) * pooled


if __name__ == "__main__":
    L, B, M = 8, 2, 16          # sentence_length, batch_size, max_word_length
    e_word = 32                 # embed_size
    V = 64                      # len(vocab.char2id)
    PAD = 0                     # vocab.char2id['<pad>']

    key = jax.random.PRNGKey(0)
    ks = jax.random.split(key, 8)
    emb_table = jax.random.normal(ks[0], (V, E_CHAR), jnp.float32) * 0.1
    emb_table = emb_table.at[PAD].set(0.0)          # padding_idx row is zero
    params = dict(
        embedding=emb_table,
        w_conv=jax.random.normal(ks[1], (e_word, E_CHAR, KERNEL), jnp.float32) * 0.1,
        b_conv=jax.random.normal(ks[2], (e_word,), jnp.float32) * 0.1,
        w_proj=jax.random.normal(ks[3], (e_word, e_word), jnp.float32) * 0.1,
        b_proj=jax.random.normal(ks[4], (e_word,), jnp.float32) * 0.1,
        w_gate=jax.random.normal(ks[5], (e_word, e_word), jnp.float32) * 0.1,
        b_gate=jax.random.normal(ks[6], (e_word,), jnp.float32) * 0.1,
    )
    input_ids = jax.random.randint(ks[7], (L, B, M), 0, V, dtype=jnp.int32)

    out = model_embeddings_forward(input_ids, params)
    jax.block_until_ready(out)
    assert out.shape == (L, B, e_word)

    ref = reference_forward(input_ids, params)
    # bf16 matmul operands + bf16 output store -> loosened tolerance vs all-f32 reference.
    np.testing.assert_allclose(np.asarray(out), np.asarray(ref), rtol=2e-2, atol=2e-2)
    print("KERNEL_OK")
</pallas_src>

<mosaic_0001>
module attributes {stable_mosaic.version = 11 : i64} {
  func.func @char_cnn_highway_kernel(%arg0: i32, %arg1: memref<16x1024xbf16, #tpu.memory_space<vmem>>, %arg2: memref<320x128xbf16, #tpu.memory_space<vmem>>, %arg3: memref<1x128xf32, #tpu.memory_space<vmem>>, %arg4: memref<128x256xbf16, #tpu.memory_space<vmem>>, %arg5: memref<1x256xf32, #tpu.memory_space<vmem>>, %arg6: memref<16x128xbf16, #tpu.memory_space<vmem>>) attributes {dimension_semantics = [#tpu.dimension_semantics<parallel>], iteration_bounds = array<i64: 1>, scalar_prefetch = 0 : i64, scratch_operands = 0 : i64, tpu.core_type = #tpu.core_type<tc>, window_params = [{transform_indices = @transform_0, window_bounds = array<i64: 16, 1024>}, {pipeline_mode = #tpu.pipeline_mode<synchronous>, transform_indices = @transform_1, window_bounds = array<i64: 320, 128>}, {pipeline_mode = #tpu.pipeline_mode<synchronous>, transform_indices = @transform_2, window_bounds = array<i64: 1, 128>}, {pipeline_mode = #tpu.pipeline_mode<synchronous>, transform_indices = @transform_3, window_bounds = array<i64: 128, 256>}, {pipeline_mode = #tpu.pipeline_mode<synchronous>, transform_indices = @transform_4, window_bounds = array<i64: 1, 256>}, {transform_indices = @transform_5, window_bounds = array<i64: 16, 128>}]} {
    %c0 = arith.constant 0 : index
    %c0_0 = arith.constant 0 : index
    %0 = vector.load %arg1[%c0, %c0_0] : memref<16x1024xbf16, #tpu.memory_space<vmem>>, vector<16x320xbf16>
    %c0_1 = arith.constant 0 : index
    %c0_2 = arith.constant 0 : index
    %1 = vector.load %arg2[%c0_1, %c0_2] : memref<320x128xbf16, #tpu.memory_space<vmem>>, vector<320x128xbf16>
    %cst = arith.constant dense<0.000000e+00> : vector<16x128xf32>
    %2 = tpu.matmul %0, %1, %cst {dimension_numbers = #tpu.dot_dimension_numbers<[1], [0], [0], [1], [0, 0, 1, 1], [], []>} : vector<16x320xbf16>, vector<320x128xbf16>, vector<16x128xf32> -> vector<16x128xf32>
    %c0_3 = arith.constant 0 : index
    %c64 = arith.constant 64 : index
    %3 = vector.load %arg1[%c0_3, %c64] : memref<16x1024xbf16, #tpu.memory_space<vmem>>, vector<16x320xbf16>
    %c0_4 = arith.constant 0 : index
    %c0_5 = arith.constant 0 : index
    %4 = vector.load %arg2[%c0_4, %c0_5] : memref<320x128xbf16, #tpu.memory_space<vmem>>, vector<320x128xbf16>
    %cst_6 = arith.constant dense<0.000000e+00> : vector<16x128xf32>
    %5 = tpu.matmul %3, %4, %cst_6 {dimension_numbers = #tpu.dot_dimension_numbers<[1], [0], [0], [1], [0, 0, 1, 1], [], []>} : vector<16x320xbf16>, vector<320x128xbf16>, vector<16x128xf32> -> vector<16x128xf32>
    %6 = arith.maximumf %2, %5 : vector<16x128xf32>
    %c0_7 = arith.constant 0 : index
    %c128 = arith.constant 128 : index
    %7 = vector.load %arg1[%c0_7, %c128] : memref<16x1024xbf16, #tpu.memory_space<vmem>>, vector<16x320xbf16>
    %c0_8 = arith.constant 0 : index
    %c0_9 = arith.constant 0 : index
    %8 = vector.load %arg2[%c0_8, %c0_9] : memref<320x128xbf16, #tpu.memory_space<vmem>>, vector<320x128xbf16>
    %cst_10 = arith.constant dense<0.000000e+00> : vector<16x128xf32>
    %9 = tpu.matmul %7, %8, %cst_10 {dimension_numbers = #tpu.dot_dimension_numbers<[1], [0], [0], [1], [0, 0, 1, 1], [], []>} : vector<16x320xbf16>, vector<320x128xbf16>, vector<16x128xf32> -> vector<16x128xf32>
    %10 = arith.maximumf %6, %9 : vector<16x128xf32>
    %c0_11 = arith.constant 0 : index
    %c192 = arith.constant 192 : index
    %11 = vector.load %arg1[%c0_11, %c192] : memref<16x1024xbf16, #tpu.memory_space<vmem>>, vector<16x320xbf16>
    %c0_12 = arith.constant 0 : index
    %c0_13 = arith.constant 0 : index
    %12 = vector.load %arg2[%c0_12, %c0_13] : memref<320x128xbf16, #tpu.memory_space<vmem>>, vector<320x128xbf16>
    %cst_14 = arith.constant dense<0.000000e+00> : vector<16x128xf32>
    %13 = tpu.matmul %11, %12, %cst_14 {dimension_numbers = #tpu.dot_dimension_numbers<[1], [0], [0], [1], [0, 0, 1, 1], [], []>} : vector<16x320xbf16>, vector<320x128xbf16>, vector<16x128xf32> -> vector<16x128xf32>
    %14 = arith.maximumf %10, %13 : vector<16x128xf32>
    %c0_15 = arith.constant 0 : index
    %c256 = arith.constant 256 : index
    %15 = vector.load %arg1[%c0_15, %c256] : memref<16x1024xbf16, #tpu.memory_space<vmem>>, vector<16x320xbf16>
    %c0_16 = arith.constant 0 : index
    %c0_17 = arith.constant 0 : index
    %16 = vector.load %arg2[%c0_16, %c0_17] : memref<320x128xbf16, #tpu.memory_space<vmem>>, vector<320x128xbf16>
    %cst_18 = arith.constant dense<0.000000e+00> : vector<16x128xf32>
    %17 = tpu.matmul %15, %16, %cst_18 {dimension_numbers = #tpu.dot_dimension_numbers<[1], [0], [0], [1], [0, 0, 1, 1], [], []>} : vector<16x320xbf16>, vector<320x128xbf16>, vector<16x128xf32> -> vector<16x128xf32>
    %18 = arith.maximumf %14, %17 : vector<16x128xf32>
    %c0_19 = arith.constant 0 : index
    %c320 = arith.constant 320 : index
    %19 = vector.load %arg1[%c0_19, %c320] : memref<16x1024xbf16, #tpu.memory_space<vmem>>, vector<16x320xbf16>
    %c0_20 = arith.constant 0 : index
    %c0_21 = arith.constant 0 : index
    %20 = vector.load %arg2[%c0_20, %c0_21] : memref<320x128xbf16, #tpu.memory_space<vmem>>, vector<320x128xbf16>
    %cst_22 = arith.constant dense<0.000000e+00> : vector<16x128xf32>
    %21 = tpu.matmul %19, %20, %cst_22 {dimension_numbers = #tpu.dot_dimension_numbers<[1], [0], [0], [1], [0, 0, 1, 1], [], []>} : vector<16x320xbf16>, vector<320x128xbf16>, vector<16x128xf32> -> vector<16x128xf32>
    %22 = arith.maximumf %18, %21 : vector<16x128xf32>
    %c0_23 = arith.constant 0 : index
    %c384 = arith.constant 384 : index
    %23 = vector.load %arg1[%c0_23, %c384] : memref<16x1024xbf16, #tpu.memory_space<vmem>>, vector<16x320xbf16>
    %c0_24 = arith.constant 0 : index
    %c0_25 = arith.constant 0 : index
    %24 = vector.load %arg2[%c0_24, %c0_25] : memref<320x128xbf16, #tpu.memory_space<vmem>>, vector<320x128xbf16>
    %cst_26 = arith.constant dense<0.000000e+00> : vector<16x128xf32>
    %25 = tpu.matmul %23, %24, %cst_26 {dimension_numbers = #tpu.dot_dimension_numbers<[1], [0], [0], [1], [0, 0, 1, 1], [], []>} : vector<16x320xbf16>, vector<320x128xbf16>, vector<16x128xf32> -> vector<16x128xf32>
    %26 = arith.maximumf %22, %25 : vector<16x128xf32>
    %c0_27 = arith.constant 0 : index
    %c448 = arith.constant 448 : index
    %27 = vector.load %arg1[%c0_27, %c448] : memref<16x1024xbf16, #tpu.memory_space<vmem>>, vector<16x320xbf16>
    %c0_28 = arith.constant 0 : index
    %c0_29 = arith.constant 0 : index
    %28 = vector.load %arg2[%c0_28, %c0_29] : memref<320x128xbf16, #tpu.memory_space<vmem>>, vector<320x128xbf16>
    %cst_30 = arith.constant dense<0.000000e+00> : vector<16x128xf32>
    %29 = tpu.matmul %27, %28, %cst_30 {dimension_numbers = #tpu.dot_dimension_numbers<[1], [0], [0], [1], [0, 0, 1, 1], [], []>} : vector<16x320xbf16>, vector<320x128xbf16>, vector<16x128xf32> -> vector<16x128xf32>
    %30 = arith.maximumf %26, %29 : vector<16x128xf32>
    %c0_31 = arith.constant 0 : index
    %c512 = arith.constant 512 : index
    %31 = vector.load %arg1[%c0_31, %c512] : memref<16x1024xbf16, #tpu.memory_space<vmem>>, vector<16x320xbf16>
    %c0_32 = arith.constant 0 : index
    %c0_33 = arith.constant 0 : index
    %32 = vector.load %arg2[%c0_32, %c0_33] : memref<320x128xbf16, #tpu.memory_space<vmem>>, vector<320x128xbf16>
    %cst_34 = arith.constant dense<0.000000e+00> : vector<16x128xf32>
    %33 = tpu.matmul %31, %32, %cst_34 {dimension_numbers = #tpu.dot_dimension_numbers<[1], [0], [0], [1], [0, 0, 1, 1], [], []>} : vector<16x320xbf16>, vector<320x128xbf16>, vector<16x128xf32> -> vector<16x128xf32>
    %34 = arith.maximumf %30, %33 : vector<16x128xf32>
    %c0_35 = arith.constant 0 : index
    %c576 = arith.constant 576 : index
    %35 = vector.load %arg1[%c0_35, %c576] : memref<16x1024xbf16, #tpu.memory_space<vmem>>, vector<16x320xbf16>
    %c0_36 = arith.constant 0 : index
    %c0_37 = arith.constant 0 : index
    %36 = vector.load %arg2[%c0_36, %c0_37] : memref<320x128xbf16, #tpu.memory_space<vmem>>, vector<320x128xbf16>
    %cst_38 = arith.constant dense<0.000000e+00> : vector<16x128xf32>
    %37 = tpu.matmul %35, %36, %cst_38 {dimension_numbers = #tpu.dot_dimension_numbers<[1], [0], [0], [1], [0, 0, 1, 1], [], []>} : vector<16x320xbf16>, vector<320x128xbf16>, vector<16x128xf32> -> vector<16x128xf32>
    %38 = arith.maximumf %34, %37 : vector<16x128xf32>
    %c0_39 = arith.constant 0 : index
    %c640 = arith.constant 640 : index
    %39 = vector.load %arg1[%c0_39, %c640] : memref<16x1024xbf16, #tpu.memory_space<vmem>>, vector<16x320xbf16>
    %c0_40 = arith.constant 0 : index
    %c0_41 = arith.constant 0 : index
    %40 = vector.load %arg2[%c0_40, %c0_41] : memref<320x128xbf16, #tpu.memory_space<vmem>>, vector<320x128xbf16>
    %cst_42 = arith.constant dense<0.000000e+00> : vector<16x128xf32>
    %41 = tpu.matmul %39, %40, %cst_42 {dimension_numbers = #tpu.dot_dimension_numbers<[1], [0], [0], [1], [0, 0, 1, 1], [], []>} : vector<16x320xbf16>, vector<320x128xbf16>, vector<16x128xf32> -> vector<16x128xf32>
    %42 = arith.maximumf %38, %41 : vector<16x128xf32>
    %c0_43 = arith.constant 0 : index
    %c704 = arith.constant 704 : index
    %43 = vector.load %arg1[%c0_43, %c704] : memref<16x1024xbf16, #tpu.memory_space<vmem>>, vector<16x320xbf16>
    %c0_44 = arith.constant 0 : index
    %c0_45 = arith.constant 0 : index
    %44 = vector.load %arg2[%c0_44, %c0_45] : memref<320x128xbf16, #tpu.memory_space<vmem>>, vector<320x128xbf16>
    %cst_46 = arith.constant dense<0.000000e+00> : vector<16x128xf32>
    %45 = tpu.matmul %43, %44, %cst_46 {dimension_numbers = #tpu.dot_dimension_numbers<[1], [0], [0], [1], [0, 0, 1, 1], [], []>} : vector<16x320xbf16>, vector<320x128xbf16>, vector<16x128xf32> -> vector<16x128xf32>
    %46 = arith.maximumf %42, %45 : vector<16x128xf32>
    %c0_47 = arith.constant 0 : index
    %c0_48 = arith.constant 0 : index
    %47 = vector.load %arg3[%c0_47, %c0_48] : memref<1x128xf32, #tpu.memory_space<vmem>>, vector<1x128xf32>
    %48 = vector.broadcast %47 : vector<1x128xf32> to vector<16x128xf32>
    %49 = arith.addf %46, %48 : vector<16x128xf32>
    %cst_49 = arith.constant 0.000000e+00 : f32
    %50 = vector.broadcast %cst_49 : f32 to vector<16x128xf32>
    %51 = arith.maximumf %49, %50 : vector<16x128xf32>
    %52 = arith.truncf %51 : vector<16x128xf32> to vector<16x128xbf16>
    %c0_50 = arith.constant 0 : index
    %c0_51 = arith.constant 0 : index
    %53 = vector.load %arg4[%c0_50, %c0_51] : memref<128x256xbf16, #tpu.memory_space<vmem>>, vector<128x256xbf16>
    %cst_52 = arith.constant dense<0.000000e+00> : vector<16x256xf32>
    %54 = tpu.matmul %52, %53, %cst_52 {dimension_numbers = #tpu.dot_dimension_numbers<[1], [0], [0], [1], [0, 0, 1, 1], [], []>} : vector<16x128xbf16>, vector<128x256xbf16>, vector<16x256xf32> -> vector<16x256xf32>
    %c0_53 = arith.constant 0 : index
    %c0_54 = arith.constant 0 : index
    %55 = vector.load %arg5[%c0_53, %c0_54] : memref<1x256xf32, #tpu.memory_space<vmem>>, vector<1x256xf32>
    %56 = vector.broadcast %55 : vector<1x256xf32> to vector<16x256xf32>
    %57 = arith.addf %54, %56 : vector<16x256xf32>
    %58 = vector.extract_strided_slice %57 {offsets = [0, 0], sizes = [16, 128], strides = [1, 1]} : vector<16x256xf32> to vector<16x128xf32>
    %cst_55 = arith.constant 0.000000e+00 : f32
    %59 = vector.broadcast %cst_55 : f32 to vector<16x128xf32>
    %60 = arith.maximumf %58, %59 : vector<16x128xf32>
    %61 = vector.extract_strided_slice %57 {offsets = [0, 128], sizes = [16, 128], strides = [1, 1]} : vector<16x256xf32> to vector<16x128xf32>
    %62 = arith.negf %61 : vector<16x128xf32>
    %63 = math.exp %62 : vector<16x128xf32>
    %cst_56 = arith.constant 1.000000e+00 : f32
    %64 = vector.broadcast %cst_56 : f32 to vector<16x128xf32>
    %65 = arith.addf %64, %63 : vector<16x128xf32>
    %66 = arith.divf %64, %65 : vector<16x128xf32>
    %67 = arith.mulf %66, %60 : vector<16x128xf32>
    %cst_57 = arith.constant 1.000000e+00 : f32
    %68 = vector.broadcast %cst_57 : f32 to vector<16x128xf32>
    %69 = arith.subf %68, %66 : vector<16x128xf32>
    %70 = arith.mulf %69, %51 : vector<16x128xf32>
    %71 = arith.addf %67, %70 : vector<16x128xf32>
    %72 = arith.truncf %71 : vector<16x128xf32> to vector<16x128xbf16>
    %c0_58 = arith.constant 0 : index
    %c0_59 = arith.constant 0 : index
    %73 = vector.load %arg6[%c0_58, %c0_59] : memref<16x128xbf16, #tpu.memory_space<vmem>>, vector<16x128xbf16>
    tpu.vector_store %arg6[%c0_58, %c0_59], %72 {strides = array<i32>} : memref<16x128xbf16, #tpu.memory_space<vmem>>, vector<16x128xbf16>,
    return
  }
  func.func @transform_0(%arg0: i32) -> (i32, i32) {
    %c0_i32 = arith.constant 0 : i32
    %c0_i32_0 = arith.constant 0 : i32
    return %arg0, %c0_i32 : i32, i32
  }
  func.func @transform_1(%arg0: i32) -> (i32, i32) {
    %c0_i32 = arith.constant 0 : i32
    %c0_i32_0 = arith.constant 0 : i32
    %c0_i32_1 = arith.constant 0 : i32
    return %c0_i32, %c0_i32_0 : i32, i32
  }
  func.func @transform_2(%arg0: i32) -> (i32, i32) {
    %c0_i32 = arith.constant 0 : i32
    %c0_i32_0 = arith.constant 0 : i32
    %c0_i32_1 = arith.constant 0 : i32
    return %c0_i32, %c0_i32_0 : i32, i32
  }
  func.func @transform_3(%arg0: i32) -> (i32, i32) {
    %c0_i32 = arith.constant 0 : i32
    %c0_i32_0 = arith.constant 0 : i32
    %c0_i32_1 = arith.constant 0 : i32
    return %c0_i32, %c0_i32_0 : i32, i32
  }
  func.func @transform_4(%arg0: i32) -> (i32, i32) {
    %c0_i32 = arith.constant 0 : i32
    %c0_i32_0 = arith.constant 0 : i32
    %c0_i32_1 = arith.constant 0 : i32
    return %c0_i32, %c0_i32_0 : i32, i32
  }
  func.func @transform_5(%arg0: i32) -> (i32, i32) {
    %c0_i32 = arith.constant 0 : i32
    %c0_i32_0 = arith.constant 0 : i32
    return %arg0, %c0_i32 : i32, i32
  }
}

</mosaic_0001>

<llo_original>
// kernel: tpu_custom_call.1
$region0: #{tpu_custom_call.1}
  #allocation0 [shape = 'u32[]', space=smem, size = 0x4, offset = 0x4, fixed_abs, tag = 'smem constant byte address 0x4 - core index']
  #allocation1 [shape = 'u32[144,128]{1,0:T(1,128)}', space=vmem, size = 0x12000, scoped, tag = 'internal scratch']
  %s0 = inlined_call_operand.hbm [shape: bf16[16,1024], index: 0, kind: input, shape index: {}]
  %s1 = inlined_call_operand.hbm [shape: bf16[320,128], index: 1, kind: input, shape index: {}]
  %s2 = inlined_call_operand.vmem [shape: f32[1,128], index: 2, kind: input, shape index: {}]
  %s3 = inlined_call_operand.hbm [shape: bf16[128,256], index: 3, kind: input, shape index: {}]
  %s4 = inlined_call_operand.vmem [shape: f32[1,256], index: 4, kind: input, shape index: {}]
  %s5 = inlined_call_operand.hbm [shape: bf16[16,128], index: 5, kind: output, shape index: {}]
  %s6 = sld [smem:[#allocation0]]
  $region42: #{tpu_custom_call.1} parent=0
    _
  %s8 = ssub.s32 1, %s6
  %s9 = scalar_select 0, %s8, %s6
  $region1: #{tpu_custom_call.1} parent=0
    #allocation2 [shape = 'u8[32768]{0}', space=vmem, size = 0x8000, scoped, tag = 'input window, operand 0, single buffered']
    #allocation3 [shape = 's32[1]{0}', space=sflag, size = 0x4, scoped, tag = 'scoped memory for tpu_custom_call.1']
    #allocation4 [shape = 's32[1]{0}', space=sflag, size = 0x4, scoped, tag = 'scoped memory for tpu_custom_call.1']
    #allocation5 [shape = 'u8[81920]{0}', space=vmem, size = 0x14000, scoped, tag = 'input window, operand 1, single buffered']
    #allocation6 [shape = 's32[1]{0}', space=sflag, size = 0x4, scoped, tag = 'scoped memory for tpu_custom_call.1']
    #allocation7 [shape = 'u8[65536]{0}', space=vmem, size = 0x10000, scoped, tag = 'input window, operand 3, single buffered']
    #allocation8 [shape = 'u8[4096]{0}', space=vmem, size = 0x1000, scoped, tag = 'output window, operand 0, single buffered']
    %10 = vsyncpa [#allocation3], 0
    %11 = vsyncpa [#allocation6], 0
    %12 = vsyncpa [#allocation4], 0
    // Predicated region
    $region2: #{tpu_custom_call.1} parent=1 // pred_check
      _
    $region3: #{tpu_custom_call.1} parent=1 // pred_check_branch
      %14 = sbr.rel (0) target = $region5
    $region4: #{tpu_custom_call.1} parent=1 // pred_region
      %s16 = ssub.s32 1024, 1024
      %17 = vsyncadd [#allocation3], %s16
      %s18 = sshll.u32 [#allocation2], 4
      %s19 = int_to_ptr.vmem [resolvable:$true] %s18
      %24 = dma.hbm_to_vmem [thread:$0]  %s0, 1024, %s19, [#allocation3], 512, 512, 32
    $region5: #{tpu_custom_call.1} parent=1 // pred_fallthru
      _
    // Predicated region
    $region6: #{tpu_custom_call.1} parent=1 // pred_check
      _
    $region7: #{tpu_custom_call.1} parent=1 // pred_check_branch
      %26 = sbr.rel (0) target = $region9
    $region8: #{tpu_custom_call.1} parent=1 // pred_region
      %s28 = ssub.s32 2560, 2560
      %29 = vsyncadd [#allocation6], %s28
      %s30 = sshll.u32 [#allocation5], 4
      %s31 = int_to_ptr.vmem [resolvable:$true] %s30
      %36 = dma.hbm_to_vmem [thread:$0]  %s1, 2560, %s31, [#allocation6], 64, 64, 4
    $region9: #{tpu_custom_call.1} parent=1 // pred_fallthru
      _
    // Predicated region
    $region10: #{tpu_custom_call.1} parent=1 // pred_check
      _
    $region11: #{tpu_custom_call.1} parent=1 // pred_check_branch
      %38 = sbr.rel (0) target = $region13
    $region12: #{tpu_custom_call.1} parent=1 // pred_region
      _
    $region13: #{tpu_custom_call.1} parent=1 // pred_fallthru
      _
    // Predicated region
    $region14: #{tpu_custom_call.1} parent=1 // pred_check
      _
    $region15: #{tpu_custom_call.1} parent=1 // pred_check_branch
      %40 = sbr.rel (0) target = $region17
    $region16: #{tpu_custom_call.1} parent=1 // pred_region
      %s42 = ssub.s32 2048, 2048
      %43 = vsyncadd [#allocation6], %s42
      %s44 = sshll.u32 [#allocation7], 4
      %s45 = int_to_ptr.vmem [resolvable:$true] %s44
      %50 = dma.hbm_to_vmem [thread:$0]  %s3, 2048, %s45, [#allocation6], 128, 128, 8
    $region17: #{tpu_custom_call.1} parent=1 // pred_fallthru
      _
    // Predicated region
    $region18: #{tpu_custom_call.1} parent=1 // pred_check
      _
    $region19: #{tpu_custom_call.1} parent=1 // pred_check_branch
      %52 = sbr.rel (0) target = $region21
    $region20: #{tpu_custom_call.1} parent=1 // pred_region
      _
    $region21: #{tpu_custom_call.1} parent=1 // pred_fallthru
      _
    // Predicated region
    $region22: #{tpu_custom_call.1} parent=1 // pred_check
      _
    $region23: #{tpu_custom_call.1} parent=1 // pred_check_branch
      %54 = sbr.rel (0) target = $region25
    $region24: #{tpu_custom_call.1} parent=1 // pred_region
      %55 = dma.done [#allocation3], 1024
    $region25: #{tpu_custom_call.1} parent=1 // pred_fallthru
      _
    // Predicated region
    $region26: #{tpu_custom_call.1} parent=1 // pred_check
      _
    $region27: #{tpu_custom_call.1} parent=1 // pred_check_branch
      %57 = sbr.rel (0) target = $region29
    $region28: #{tpu_custom_call.1} parent=1 // pred_region
      %58 = dma.done [#allocation6], 2560
    $region29: #{tpu_custom_call.1} parent=1 // pred_fallthru
      _
    // Predicated region
    $region30: #{tpu_custom_call.1} parent=1 // pred_check
      _
    $region31: #{tpu_custom_call.1} parent=1 // pred_check_branch
      %60 = sbr.rel (0) target = $region33
    $region32: #{tpu_custom_call.1} parent=1 // pred_region
      %61 = dma.done [#allocation6], 2048
    $region33: #{tpu_custom_call.1} parent=1 // pred_fallthru
      _
    %v63 = vld [vmem:[#allocation2] sm:$0xff]
    %v64 = vld [vmem:[#allocation2 + $0x8] sm:$0xf]
    %v65 = vld [vmem:[#allocation2 + $0x20] sm:$0xff]
    %v66 = vld [vmem:[#allocation2 + $0x28] sm:$0xf]
    %v67 = vld [vmem:[#allocation5] sm:$0xf]
    %v68 = vld [vmem:[#allocation5 + $0x4] sm:$0xf]
    %v69 = vld [vmem:[#allocation5 + $0x8] sm:$0xf]
    %v70 = vld [vmem:[#allocation5 + $0xc] sm:$0xf]
    %v71 = vld [vmem:[#allocation5 + $0x10] sm:$0xf]
    %v72 = vld [vmem:[#allocation5 + $0x14] sm:$0xf]
    %v73 = vld [vmem:[#allocation5 + $0x18] sm:$0xf]
    %v74 = vld [vmem:[#allocation5 + $0x1c] sm:$0xf]
    %v75 = vld [vmem:[#allocation5 + $0x20] sm:$0xf]
    %v76 = vld [vmem:[#allocation5 + $0x24] sm:$0xf]
    %v77 = vld [vmem:[#allocation5 + $0x28] sm:$0xf]
    %v78 = vld [vmem:[#allocation5 + $0x2c] sm:$0xf]
    %v79 = vld [vmem:[#allocation5 + $0x30] sm:$0xf]
    %v80 = vld [vmem:[#allocation5 + $0x34] sm:$0xf]
    %v81 = vld [vmem:[#allocation5 + $0x38] sm:$0xf]
    %v82 = vld [vmem:[#allocation5 + $0x3c] sm:$0xf]
    %v83 = vld [vmem:[#allocation5 + $0x40] sm:$0xf]
    %v84 = vld [vmem:[#allocation5 + $0x44] sm:$0xf]
    %v85 = vld [vmem:[#allocation5 + $0x48] sm:$0xf]
    %v86 = vld [vmem:[#allocation5 + $0x4c] sm:$0xf]
    %v87 = vld [vmem:[#allocation5 + $0x50] sm:$0xf]
    %v88 = vld [vmem:[#allocation5 + $0x54] sm:$0xf]
    %v89 = vld [vmem:[#allocation5 + $0x58] sm:$0xf]
    %v90 = vld [vmem:[#allocation5 + $0x5c] sm:$0xf]
    %v91 = vld [vmem:[#allocation5 + $0x60] sm:$0xf]
    %v92 = vld [vmem:[#allocation5 + $0x64] sm:$0xf]
    %v93 = vld [vmem:[#allocation5 + $0x68] sm:$0xf]
    %v94 = vld [vmem:[#allocation5 + $0x6c] sm:$0xf]
    %v95 = vld [vmem:[#allocation5 + $0x70] sm:$0xf]
    %v96 = vld [vmem:[#allocation5 + $0x74] sm:$0xf]
    %v97 = vld [vmem:[#allocation5 + $0x78] sm:$0xf]
    %v98 = vld [vmem:[#allocation5 + $0x7c] sm:$0xf]
    %v99 = vld [vmem:[#allocation5 + $0x80] sm:$0xf]
    %v100 = vld [vmem:[#allocation5 + $0x84] sm:$0xf]
    %v101 = vld [vmem:[#allocation5 + $0x88] sm:$0xf]
    %v102 = vld [vmem:[#allocation5 + $0x8c] sm:$0xf]
    %v103 = vld [vmem:[#allocation5 + $0x90] sm:$0xf]
    %v104 = vld [vmem:[#allocation5 + $0x94] sm:$0xf]
    %v105 = vld [vmem:[#allocation5 + $0x98] sm:$0xf]
    %v106 = vld [vmem:[#allocation5 + $0x9c] sm:$0xf]
    %v111 = vunpack.c.l.b16 %v63
    %v112 = vunpack.c.h.b16 %v63
    %v113 = vunpack.c.l.b16 %v64
    %v114 = vunpack.c.l.b16 %v65
    %v115 = vunpack.c.h.b16 %v65
    %v116 = vunpack.c.l.b16 %v66
    %v117 = vpack.c.b16 %v114, %v111
    %v118 = vpack.c.b16 %v115, %v112
    %v119 = vpack.c.b16 %v116, %v113
    %v162 = vunpack.c.l.b16 %v67
    %v163 = vunpack.c.l.b16 %v68
    %v164 = vunpack.c.l.b16 %v69
    %v165 = vunpack.c.l.b16 %v70
    %v166 = vunpack.c.l.b16 %v71
    %v167 = vunpack.c.l.b16 %v72
    %v168 = vunpack.c.l.b16 %v73
    %v169 = vunpack.c.l.b16 %v74
    %v170 = vunpack.c.l.b16 %v75
    %v171 = vunpack.c.l.b16 %v76
    %v172 = vunpack.c.l.b16 %v77
    %v173 = vunpack.c.l.b16 %v78
    %v174 = vunpack.c.l.b16 %v79
    %v175 = vunpack.c.l.b16 %v80
    %v176 = vunpack.c.l.b16 %v81
    %v177 = vunpack.c.l.b16 %v82
    %v178 = vunpack.c.l.b16 %v83
    %v179 = vunpack.c.l.b16 %v84
    %v180 = vunpack.c.l.b16 %v85
    %v181 = vunpack.c.l.b16 %v86
    %v182 = vunpack.c.l.b16 %v87
    %v183 = vunpack.c.l.b16 %v88
    %v184 = vunpack.c.l.b16 %v89
    %v185 = vunpack.c.l.b16 %v90
    %v186 = vunpack.c.l.b16 %v91
    %v187 = vunpack.c.l.b16 %v92
    %v188 = vunpack.c.l.b16 %v93
    %v189 = vunpack.c.l.b16 %v94
    %v190 = vunpack.c.l.b16 %v95
    %v191 = vunpack.c.l.b16 %v96
    %v192 = vunpack.c.l.b16 %v97
    %v193 = vunpack.c.l.b16 %v98
    %v194 = vunpack.c.l.b16 %v99
    %v195 = vunpack.c.l.b16 %v100
    %v196 = vunpack.c.l.b16 %v101
    %v197 = vunpack.c.l.b16 %v102
    %v198 = vunpack.c.l.b16 %v103
    %v199 = vunpack.c.l.b16 %v104
    %v200 = vunpack.c.l.b16 %v105
    %v201 = vunpack.c.l.b16 %v106
    %v202 = vpack.c.b16 %v163, %v162
    %v203 = vpack.c.b16 %v165, %v164
    %v204 = vpack.c.b16 %v167, %v166
    %v205 = vpack.c.b16 %v169, %v168
    %v206 = vpack.c.b16 %v171, %v170
    %v207 = vpack.c.b16 %v173, %v172
    %v208 = vpack.c.b16 %v175, %v174
    %v209 = vpack.c.b16 %v177, %v176
    %v210 = vpack.c.b16 %v179, %v178
    %v211 = vpack.c.b16 %v181, %v180
    %v212 = vpack.c.b16 %v183, %v182
    %v213 = vpack.c.b16 %v185, %v184
    %v214 = vpack.c.b16 %v187, %v186
    %v215 = vpack.c.b16 %v189, %v188
    %v216 = vpack.c.b16 %v191, %v190
    %v217 = vpack.c.b16 %v193, %v192
    %v218 = vpack.c.b16 %v195, %v194
    %v219 = vpack.c.b16 %v197, %v196
    %v220 = vpack.c.b16 %v199, %v198
    %v221 = vpack.c.b16 %v201, %v200
    %vm242 = vcmask 523264
    %v244 = vsel %vm242, %v119, 0
    %246 = vmatprep.subr.bf16.mxu0 0
    %247 = vmatpush1.bf16.msra.mxu0 %v209
    %248 = vmatprep.subr.bf16.mxu0 0
    %249 = vmatpush1.bf16.msra.mxu0 %v208
    %250 = vmatprep.subr.bf16.mxu0 0
    %251 = vmatpush1.bf16.msra.mxu0 %v207
    %252 = vmatprep.subr.bf16.mxu0 0
    %253 = vmatpush1.bf16.msra.mxu0 %v206
    %254 = vmatprep.subr.bf16.mxu0 0
    %255 = vmatpush1.bf16.msra.mxu0 %v205
    %256 = vmatprep.subr.bf16.mxu0 0
    %257 = vmatpush1.bf16.msra.mxu0 %v204
    %258 = vmatprep.subr.bf16.mxu0 0
    %259 = vmatpush1.bf16.msra.mxu0 %v203
    %260 = vmatprep.subr.bf16.mxu0 0
    %261 = vmatpush1.bf16.msra.mxu0 %v202
    %262 = vmatprep.subr.bf16.mxu0 0
    %263 = vmatpush2.bf16.msra.mxu0 %v217
    %264 = vmatprep.subr.bf16.mxu0 0
    %265 = vmatpush2.bf16.msra.mxu0 %v216
    %266 = vmatprep.subr.bf16.mxu0 0
    %267 = vmatpush2.bf16.msra.mxu0 %v215
    %268 = vmatprep.subr.bf16.mxu0 0
    %269 = vmatpush2.bf16.msra.mxu0 %v214
    %270 = vmatprep.subr.bf16.mxu0 0
    %271 = vmatpush2.bf16.msra.mxu0 %v213
    %272 = vmatprep.subr.bf16.mxu0 0
    %273 = vmatpush2.bf16.msra.mxu0 %v212
    %274 = vmatprep.subr.bf16.mxu0 0
    %275 = vmatpush2.bf16.msra.mxu0 %v211
    %276 = vmatprep.subr.bf16.mxu0 0
    %277 = vmatpush2.bf16.msra.mxu0 %v210
    %278 = vmatprep.mubr.bf16.mxu0 %v118
    %279 = vmatmul.mubr.bf16.gmra.mxu0 %v117
    %v280 = vpop.f32.mrf.mxu0
    %v281 = vadd.f32 0.0, %v280
    %v282 = vpop.f32.mrf.mxu0
    %v283 = vpop.f32.mrf.mxu0
    %v284 = vadd.f32 0.0, %v283
    %v285 = vpop.f32.mrf.mxu0
    %286 = vdwg.mxu0
    %287 = vmatprep.subr.bf16.mxu0 0
    %288 = vmatpush1.bf16.msra.mxu0 0
    %289 = vmatprep.subr.bf16.mxu0 0
    %290 = vmatpush1.bf16.msra.mxu0 0
    %291 = vmatprep.subr.bf16.mxu0 0
    %292 = vmatpush1.bf16.msra.mxu0 0
    %293 = vmatprep.subr.bf16.mxu0 0
    %294 = vmatpush1.bf16.msra.mxu0 0
    %295 = vmatprep.subr.bf16.mxu0 0
    %296 = vmatpush1.bf16.msra.mxu0 %v221
    %297 = vmatprep.subr.bf16.mxu0 0
    %298 = vmatpush1.bf16.msra.mxu0 %v220
    %299 = vmatprep.subr.bf16.mxu0 0
    %300 = vmatpush1.bf16.msra.mxu0 %v219
    %301 = vmatprep.subr.bf16.mxu0 0
    %302 = vmatpush1.bf16.msra.mxu0 %v218
    %303 = vmatprep.subr.bf16.mxu0 0
    %304 = vmatpush2.bf16.msra.mxu0 0
    %305 = vmatprep.subr.bf16.mxu0 0
    %306 = vmatpush2.bf16.msra.mxu0 0
    %307 = vmatprep.subr.bf16.mxu0 0
    %308 = vmatpush2.bf16.msra.mxu0 0
    %309 = vmatprep.subr.bf16.mxu0 0
    %310 = vmatpush2.bf16.msra.mxu0 0
    %311 = vmatprep.subr.bf16.mxu0 0
    %312 = vmatpush2.bf16.msra.mxu0 0
    %313 = vmatprep.subr.bf16.mxu0 0
    %314 = vmatpush2.bf16.msra.mxu0 0
    %315 = vmatprep.subr.bf16.mxu0 0
    %316 = vmatpush2.bf16.msra.mxu0 0
    %317 = vmatprep.subr.bf16.mxu0 0
    %318 = vmatpush2.bf16.msra.mxu0 0
    %319 = vmatprep.mubr.bf16.mxu0 0
    %320 = vmatmul.mubr.bf16.gmra.mxu0 %v244
    %v321 = vpop.f32.mrf.mxu0
    %v322 = vadd.f32 %v281, %v321
    %v323 = vpop.f32.mrf.mxu0
    %v324 = vpop.f32.mrf.mxu0
    %v325 = vadd.f32 %v284, %v324
    %v326 = vpop.f32.mrf.mxu0
    %327 = vdwg.mxu0
    %328 = vrot.lane.b32.xlu0 %v117, 64
    %v329 = vpop.permute.xlu0 %328
    %330 = vrot.lane.b32.xlu0 %v118, 64
    %v331 = vpop.permute.xlu0 %330
    %332 = vrot.lane.b32.xlu0 %v119, 64
    %v333 = vpop.permute.xlu0 %332
    %vm334 = vcmask 523264
    %v335 = vsel %vm334, %v329, %v331
    %v336 = vsel %vm334, %v331, %v333
    %v340 = vsel %vm242, %v333, 0
    %342 = vmatprep.subr.bf16.mxu0 0
    %343 = vmatpush1.bf16.msra.mxu0 %v209
    %344 = vmatprep.subr.bf16.mxu0 0
    %345 = vmatpush1.bf16.msra.mxu0 %v208
    %346 = vmatprep.subr.bf16.mxu0 0
    %347 = vmatpush1.bf16.msra.mxu0 %v207
    %348 = vmatprep.subr.bf16.mxu0 0
    %349 = vmatpush1.bf16.msra.mxu0 %v206
    %350 = vmatprep.subr.bf16.mxu0 0
    %351 = vmatpush1.bf16.msra.mxu0 %v205
    %352 = vmatprep.subr.bf16.mxu0 0
    %353 = vmatpush1.bf16.msra.mxu0 %v204
    %354 = vmatprep.subr.bf16.mxu0 0
    %355 = vmatpush1.bf16.msra.mxu0 %v203
    %356 = vmatprep.subr.bf16.mxu0 0
    %357 = vmatpush1.bf16.msra.mxu0 %v202
    %358 = vmatprep.subr.bf16.mxu0 0
    %359 = vmatpush2.bf16.msra.mxu0 %v217
    %360 = vmatprep.subr.bf16.mxu0 0
    %361 = vmatpush2.bf16.msra.mxu0 %v216
    %362 = vmatprep.subr.bf16.mxu0 0
    %363 = vmatpush2.bf16.msra.mxu0 %v215
    %364 = vmatprep.subr.bf16.mxu0 0
    %365 = vmatpush2.bf16.msra.mxu0 %v214
    %366 = vmatprep.subr.bf16.mxu0 0
    %367 = vmatpush2.bf16.msra.mxu0 %v213
    %368 = vmatprep.subr.bf16.mxu0 0
    %369 = vmatpush2.bf16.msra.mxu0 %v212
    %370 = vmatprep.subr.bf16.mxu0 0
    %371 = vmatpush2.bf16.msra.mxu0 %v211
    %372 = vmatprep.subr.bf16.mxu0 0
    %373 = vmatpush2.bf16.msra.mxu0 %v210
    %374 = vmatprep.mubr.bf16.mxu0 %v336
    %375 = vmatmul.mubr.bf16.gmra.mxu0 %v335
    %v376 = vpop.f32.mrf.mxu0
    %v377 = vadd.f32 0.0, %v376
    %v378 = vpop.f32.mrf.mxu0
    %v379 = vpop.f32.mrf.mxu0
    %v380 = vadd.f32 0.0, %v379
    %v381 = vpop.f32.mrf.mxu0
    %382 = vdwg.mxu0
    %383 = vmatprep.subr.bf16.mxu0 0
    %384 = vmatpush1.bf16.msra.mxu0 0
    %385 = vmatprep.subr.bf16.mxu0 0
    %386 = vmatpush1.bf16.msra.mxu0 0
    %387 = vmatprep.subr.bf16.mxu0 0
    %388 = vmatpush1.bf16.msra.mxu0 0
    %389 = vmatprep.subr.bf16.mxu0 0
    %390 = vmatpush1.bf16.msra.mxu0 0
    %391 = vmatprep.subr.bf16.mxu0 0
    %392 = vmatpush1.bf16.msra.mxu0 %v221
    %393 = vmatprep.subr.bf16.mxu0 0
    %394 = vmatpush1.bf16.msra.mxu0 %v220
    %395 = vmatprep.subr.bf16.mxu0 0
    %396 = vmatpush1.bf16.msra.mxu0 %v219
    %397 = vmatprep.subr.bf16.mxu0 0
    %398 = vmatpush1.bf16.msra.mxu0 %v218
    %399 = vmatprep.subr.bf16.mxu0 0
    %400 = vmatpush2.bf16.msra.mxu0 0
    %401 = vmatprep.subr.bf16.mxu0 0
    %402 = vmatpush2.bf16.msra.mxu0 0
    %403 = vmatprep.subr.bf16.mxu0 0
    %404 = vmatpush2.bf16.msra.mxu0 0
    %405 = vmatprep.subr.bf16.mxu0 0
    %406 = vmatpush2.bf16.msra.mxu0 0
    %407 = vmatprep.subr.bf16.mxu0 0
    %408 = vmatpush2.bf16.msra.mxu0 0
    %409 = vmatprep.subr.bf16.mxu0 0
    %410 = vmatpush2.bf16.msra.mxu0 0
    %411 = vmatprep.subr.bf16.mxu0 0
    %412 = vmatpush2.bf16.msra.mxu0 0
    %413 = vmatprep.subr.bf16.mxu0 0
    %414 = vmatpush2.bf16.msra.mxu0 0
    %415 = vmatprep.mubr.bf16.mxu0 0
    %416 = vmatmul.mubr.bf16.gmra.mxu0 %v340
    %v417 = vpop.f32.mrf.mxu0
    %v418 = vadd.f32 %v377, %v417
    %v419 = vpop.f32.mrf.mxu0
    %v420 = vpop.f32.mrf.mxu0
    %v421 = vadd.f32 %v380, %v420
    %v422 = vpop.f32.mrf.mxu0
    %423 = vdwg.mxu0
    %v424 = vmax.f32 %v322, %v418
    %v425 = vmax.f32 %v325, %v421
    %v426 = vld [vmem:[#allocation2 + $0x4] sm:$0xff]
    %v427 = vld [vmem:[#allocation2 + $0xc] sm:$0xf]
    %v428 = vld [vmem:[#allocation2 + $0x24] sm:$0xff]
    %v429 = vld [vmem:[#allocation2 + $0x2c] sm:$0xf]
    %v434 = vunpack.c.l.b16 %v426
    %v435 = vunpack.c.h.b16 %v426
    %v436 = vunpack.c.l.b16 %v427
    %v437 = vunpack.c.l.b16 %v428
    %v438 = vunpack.c.h.b16 %v428
    %v439 = vunpack.c.l.b16 %v429
    %v440 = vpack.c.b16 %v437, %v434
    %v441 = vpack.c.b16 %v438, %v435
    %v442 = vpack.c.b16 %v439, %v436
    %v446 = vsel %vm242, %v442, 0
    %448 = vmatprep.subr.bf16.mxu0 0
    %449 = vmatpush1.bf16.msra.mxu0 %v209
    %450 = vmatprep.subr.bf16.mxu0 0
    %451 = vmatpush1.bf16.msra.mxu0 %v208
    %452 = vmatprep.subr.bf16.mxu0 0
    %453 = vmatpush1.bf16.msra.mxu0 %v207
    %454 = vmatprep.subr.bf16.mxu0 0
    %455 = vmatpush1.bf16.msra.mxu0 %v206
    %456 = vmatprep.subr.bf16.mxu0 0
    %457 = vmatpush1.bf16.msra.mxu0 %v205
    %458 = vmatprep.subr.bf16.mxu0 0
    %459 = vmatpush1.bf16.msra.mxu0 %v204
    %460 = vmatprep.subr.bf16.mxu0 0
    %461 = vmatpush1.bf16.msra.mxu0 %v203
    %462 = vmatprep.subr.bf16.mxu0 0
    %463 = vmatpush1.bf16.msra.mxu0 %v202
    %464 = vmatprep.subr.bf16.mxu0 0
    %465 = vmatpush2.bf16.msra.mxu0 %v217
    %466 = vmatprep.subr.bf16.mxu0 0
    %467 = vmatpush2.bf16.msra.mxu0 %v216
    %468 = vmatprep.subr.bf16.mxu0 0
    %469 = vmatpush2.bf16.msra.mxu0 %v215
    %470 = vmatprep.subr.bf16.mxu0 0
    %471 = vmatpush2.bf16.msra.mxu0 %v214
    %472 = vmatprep.subr.bf16.mxu0 0
    %473 = vmatpush2.bf16.msra.mxu0 %v213
    %474 = vmatprep.subr.bf16.mxu0 0
    %475 = vmatpush2.bf16.msra.mxu0 %v212
    %476 = vmatprep.subr.bf16.mxu0 0
    %477 = vmatpush2.bf16.msra.mxu0 %v211
    %478 = vmatprep.subr.bf16.mxu0 0
    %479 = vmatpush2.bf16.msra.mxu0 %v210
    %480 = vmatprep.mubr.bf16.mxu0 %v441
    %481 = vmatmul.mubr.bf16.gmra.mxu0 %v440
    %v482 = vpop.f32.mrf.mxu0
    %v483 = vadd.f32 0.0, %v482
    %v484 = vpop.f32.mrf.mxu0
    %v485 = vpop.f32.mrf.mxu0
    %v486 = vadd.f32 0.0, %v485
    %v487 = vpop.f32.mrf.mxu0
    %488 = vdwg.mxu0
    %489 = vmatprep.subr.bf16.mxu0 0
    %490 = vmatpush1.bf16.msra.mxu0 0
    %491 = vmatprep.subr.bf16.mxu0 0
    %492 = vmatpush1.bf16.msra.mxu0 0
    %493 = vmatprep.subr.bf16.mxu0 0
    %494 = vmatpush1.bf16.msra.mxu0 0
    %495 = vmatprep.subr.bf16.mxu0 0
    %496 = vmatpush1.bf16.msra.mxu0 0
    %497 = vmatprep.subr.bf16.mxu0 0
    %498 = vmatpush1.bf16.msra.mxu0 %v221
    %499 = vmatprep.subr.bf16.mxu0 0
    %500 = vmatpush1.bf16.msra.mxu0 %v220
    %501 = vmatprep.subr.bf16.mxu0 0
    %502 = vmatpush1.bf16.msra.mxu0 %v219
    %503 = vmatprep.subr.bf16.mxu0 0
    %504 = vmatpush1.bf16.msra.mxu0 %v218
    %505 = vmatprep.subr.bf16.mxu0 0
    %506 = vmatpush2.bf16.msra.mxu0 0
    %507 = vmatprep.subr.bf16.mxu0 0
    %508 = vmatpush2.bf16.msra.mxu0 0
    %509 = vmatprep.subr.bf16.mxu0 0
    %510 = vmatpush2.bf16.msra.mxu0 0
    %511 = vmatprep.subr.bf16.mxu0 0
    %512 = vmatpush2.bf16.msra.mxu0 0
    %513 = vmatprep.subr.bf16.mxu0 0
    %514 = vmatpush2.bf16.msra.mxu0 0
    %515 = vmatprep.subr.bf16.mxu0 0
    %516 = vmatpush2.bf16.msra.mxu0 0
    %517 = vmatprep.subr.bf16.mxu0 0
    %518 = vmatpush2.bf16.msra.mxu0 0
    %519 = vmatprep.subr.bf16.mxu0 0
    %520 = vmatpush2.bf16.msra.mxu0 0
    %521 = vmatprep.mubr.bf16.mxu0 0
    %522 = vmatmul.mubr.bf16.gmra.mxu0 %v446
    %v523 = vpop.f32.mrf.mxu0
    %v524 = vadd.f32 %v483, %v523
    %v525 = vpop.f32.mrf.mxu0
    %v526 = vpop.f32.mrf.mxu0
    %v527 = vadd.f32 %v486, %v526
    %v528 = vpop.f32.mrf.mxu0
    %529 = vdwg.mxu0
    %v530 = vmax.f32 %v424, %v524
    %v531 = vmax.f32 %v425, %v527
    %532 = vrot.lane.b32.xlu0 %v440, 64
    %v533 = vpop.permute.xlu0 %532
    %534 = vrot.lane.b32.xlu0 %v441, 64
    %v535 = vpop.permute.xlu0 %534
    %536 = vrot.lane.b32.xlu0 %v442, 64
    %v537 = vpop.permute.xlu0 %536
    %v538 = vsel %vm334, %v533, %v535
    %v539 = vsel %vm334, %v535, %v537
    %v543 = vsel %vm242, %v537, 0
    %545 = vmatprep.subr.bf16.mxu0 0
    %546 = vmatpush1.bf16.msra.mxu0 %v209
    %547 = vmatprep.subr.bf16.mxu0 0
    %548 = vmatpush1.bf16.msra.mxu0 %v208
    %549 = vmatprep.subr.bf16.mxu0 0
    %550 = vmatpush1.bf16.msra.mxu0 %v207
    %551 = vmatprep.subr.bf16.mxu0 0
    %552 = vmatpush1.bf16.msra.mxu0 %v206
    %553 = vmatprep.subr.bf16.mxu0 0
    %554 = vmatpush1.bf16.msra.mxu0 %v205
    %555 = vmatprep.subr.bf16.mxu0 0
    %556 = vmatpush1.bf16.msra.mxu0 %v204
    %557 = vmatprep.subr.bf16.mxu0 0
    %558 = vmatpush1.bf16.msra.mxu0 %v203
    %559 = vmatprep.subr.bf16.mxu0 0
    %560 = vmatpush1.bf16.msra.mxu0 %v202
    %561 = vmatprep.subr.bf16.mxu0 0
    %562 = vmatpush2.bf16.msra.mxu0 %v217
    %563 = vmatprep.subr.bf16.mxu0 0
    %564 = vmatpush2.bf16.msra.mxu0 %v216
    %565 = vmatprep.subr.bf16.mxu0 0
    %566 = vmatpush2.bf16.msra.mxu0 %v215
    %567 = vmatprep.subr.bf16.mxu0 0
    %568 = vmatpush2.bf16.msra.mxu0 %v214
    %569 = vmatprep.subr.bf16.mxu0 0
    %570 = vmatpush2.bf16.msra.mxu0 %v213
    %571 = vmatprep.subr.bf16.mxu0 0
    %572 = vmatpush2.bf16.msra.mxu0 %v212
    %573 = vmatprep.subr.bf16.mxu0 0
    %574 = vmatpush2.bf16.msra.mxu0 %v211
    %575 = vmatprep.subr.bf16.mxu0 0
    %576 = vmatpush2.bf16.msra.mxu0 %v210
    %577 = vmatprep.mubr.bf16.mxu0 %v539
    %578 = vmatmul.mubr.bf16.gmra.mxu0 %v538
    %v579 = vpop.f32.mrf.mxu0
    %v580 = vadd.f32 0.0, %v579
    %v581 = vpop.f32.mrf.mxu0
    %v582 = vpop.f32.mrf.mxu0
    %v583 = vadd.f32 0.0, %v582
    %v584 = vpop.f32.mrf.mxu0
    %585 = vdwg.mxu0
    %586 = vmatprep.subr.bf16.mxu0 0
    %587 = vmatpush1.bf16.msra.mxu0 0
    %588 = vmatprep.subr.bf16.mxu0 0
    %589 = vmatpush1.bf16.msra.mxu0 0
    %590 = vmatprep.subr.bf16.mxu0 0
    %591 = vmatpush1.bf16.msra.mxu0 0
    %592 = vmatprep.subr.bf16.mxu0 0
    %593 = vmatpush1.bf16.msra.mxu0 0
    %594 = vmatprep.subr.bf16.mxu0 0
    %595 = vmatpush1.bf16.msra.mxu0 %v221
    %596 = vmatprep.subr.bf16.mxu0 0
    %597 = vmatpush1.bf16.msra.mxu0 %v220
    %598 = vmatprep.subr.bf16.mxu0 0
    %599 = vmatpush1.bf16.msra.mxu0 %v219
    %600 = vmatprep.subr.bf16.mxu0 0
    %601 = vmatpush1.bf16.msra.mxu0 %v218
    %602 = vmatprep.subr.bf16.mxu0 0
    %603 = vmatpush2.bf16.msra.mxu0 0
    %604 = vmatprep.subr.bf16.mxu0 0
    %605 = vmatpush2.bf16.msra.mxu0 0
    %606 = vmatprep.subr.bf16.mxu0 0
    %607 = vmatpush2.bf16.msra.mxu0 0
    %608 = vmatprep.subr.bf16.mxu0 0
    %609 = vmatpush2.bf16.msra.mxu0 0
    %610 = vmatprep.subr.bf16.mxu0 0
    %611 = vmatpush2.bf16.msra.mxu0 0
    %612 = vmatprep.subr.bf16.mxu0 0
    %613 = vmatpush2.bf16.msra.mxu0 0
    %614 = vmatprep.subr.bf16.mxu0 0
    %615 = vmatpush2.bf16.msra.mxu0 0
    %616 = vmatprep.subr.bf16.mxu0 0
    %617 = vmatpush2.bf16.msra.mxu0 0
    %618 = vmatprep.mubr.bf16.mxu0 0
    %619 = vmatmul.mubr.bf16.gmra.mxu0 %v543
    %v620 = vpop.f32.mrf.mxu0
    %v621 = vadd.f32 %v580, %v620
    %v622 = vpop.f32.mrf.mxu0
    %v623 = vpop.f32.mrf.mxu0
    %v624 = vadd.f32 %v583, %v623
    %v625 = vpop.f32.mrf.mxu0
    %626 = vdwg.mxu0
    %v627 = vmax.f32 %v530, %v621
    %v628 = vmax.f32 %v531, %v624
    %v629 = vld [vmem:[#allocation2 + $0x8] sm:$0xff]
    %v630 = vld [vmem:[#allocation2 + $0x10] sm:$0xf]
    %v631 = vld [vmem:[#allocation2 + $0x28] sm:$0xff]
    %v632 = vld [vmem:[#allocation2 + $0x30] sm:$0xf]
    %v637 = vunpack.c.l.b16 %v629
    %v638 = vunpack.c.h.b16 %v629
    %v639 = vunpack.c.l.b16 %v630
    %v640 = vunpack.c.l.b16 %v631
    %v641 = vunpack.c.h.b16 %v631
    %v642 = vunpack.c.l.b16 %v632
    %v643 = vpack.c.b16 %v640, %v637
    %v644 = vpack.c.b16 %v641, %v638
    %v645 = vpack.c.b16 %v642, %v639
    %v649 = vsel %vm242, %v645, 0
    %651 = vmatprep.subr.bf16.mxu0 0
    %652 = vmatpush1.bf16.msra.mxu0 %v209
    %653 = vmatprep.subr.bf16.mxu0 0
    %654 = vmatpush1.bf16.msra.mxu0 %v208
    %655 = vmatprep.subr.bf16.mxu0 0
    %656 = vmatpush1.bf16.msra.mxu0 %v207
    %657 = vmatprep.subr.bf16.mxu0 0
    %658 = vmatpush1.bf16.msra.mxu0 %v206
    %659 = vmatprep.subr.bf16.mxu0 0
    %660 = vmatpush1.bf16.msra.mxu0 %v205
    %661 = vmatprep.subr.bf16.mxu0 0
    %662 = vmatpush1.bf16.msra.mxu0 %v204
    %663 = vmatprep.subr.bf16.mxu0 0
    %664 = vmatpush1.bf16.msra.mxu0 %v203
    %665 = vmatprep.subr.bf16.mxu0 0
    %666 = vmatpush1.bf16.msra.mxu0 %v202
    %667 = vmatprep.subr.bf16.mxu0 0
    %668 = vmatpush2.bf16.msra.mxu0 %v217
    %669 = vmatprep.subr.bf16.mxu0 0
    %670 = vmatpush2.bf16.msra.mxu0 %v216
    %671 = vmatprep.subr.bf16.mxu0 0
    %672 = vmatpush2.bf16.msra.mxu0 %v215
    %673 = vmatprep.subr.bf16.mxu0 0
    %674 = vmatpush2.bf16.msra.mxu0 %v214
    %675 = vmatprep.subr.bf16.mxu0 0
    %676 = vmatpush2.bf16.msra.mxu0 %v213
    %677 = vmatprep.subr.bf16.mxu0 0
    %678 = vmatpush2.bf16.msra.mxu0 %v212
    %679 = vmatprep.subr.bf16.mxu0 0
    %680 = vmatpush2.bf16.msra.mxu0 %v211
    %681 = vmatprep.subr.bf16.mxu0 0
    %682 = vmatpush2.bf16.msra.mxu0 %v210
    %683 = vmatprep.mubr.bf16.mxu0 %v644
    %684 = vmatmul.mubr.bf16.gmra.mxu0 %v643
    %v685 = vpop.f32.mrf.mxu0
    %v686 = vadd.f32 0.0, %v685
    %v687 = vpop.f32.mrf.mxu0
    %v688 = vpop.f32.mrf.mxu0
    %v689 = vadd.f32 0.0, %v688
    %v690 = vpop.f32.mrf.mxu0
    %691 = vdwg.mxu0
    %692 = vmatprep.subr.bf16.mxu0 0
    %693 = vmatpush1.bf16.msra.mxu0 0
    %694 = vmatprep.subr.bf16.mxu0 0
    %695 = vmatpush1.bf16.msra.mxu0 0
    %696 = vmatprep.subr.bf16.mxu0 0
    %697 = vmatpush1.bf16.msra.mxu0 0
    %698 = vmatprep.subr.bf16.mxu0 0
    %699 = vmatpush1.bf16.msra.mxu0 0
    %700 = vmatprep.subr.bf16.mxu0 0
    %701 = vmatpush1.bf16.msra.mxu0 %v221
    %702 = vmatprep.subr.bf16.mxu0 0
    %703 = vmatpush1.bf16.msra.mxu0 %v220
    %704 = vmatprep.subr.bf16.mxu0 0
    %705 = vmatpush1.bf16.msra.mxu0 %v219
    %706 = vmatprep.subr.bf16.mxu0 0
    %707 = vmatpush1.bf16.msra.mxu0 %v218
    %708 = vmatprep.subr.bf16.mxu0 0
    %709 = vmatpush2.bf16.msra.mxu0 0
    %710 = vmatprep.subr.bf16.mxu0 0
    %711 = vmatpush2.bf16.msra.mxu0 0
    %712 = vmatprep.subr.bf16.mxu0 0
    %713 = vmatpush2.bf16.msra.mxu0 0
    %714 = vmatprep.subr.bf16.mxu0 0
    %715 = vmatpush2.bf16.msra.mxu0 0
    %716 = vmatprep.subr.bf16.mxu0 0
    %717 = vmatpush2.bf16.msra.mxu0 0
    %718 = vmatprep.subr.bf16.mxu0 0
    %719 = vmatpush2.bf16.msra.mxu0 0
    %720 = vmatprep.subr.bf16.mxu0 0
    %721 = vmatpush2.bf16.msra.mxu0 0
    %722 = vmatprep.subr.bf16.mxu0 0
    %723 = vmatpush2.bf16.msra.mxu0 0
    %724 = vmatprep.mubr.bf16.mxu0 0
    %725 = vmatmul.mubr.bf16.gmra.mxu0 %v649
    %v726 = vpop.f32.mrf.mxu0
    %v727 = vadd.f32 %v686, %v726
    %v728 = vpop.f32.mrf.mxu0
    %v729 = vpop.f32.mrf.mxu0
    %v730 = vadd.f32 %v689, %v729
    %v731 = vpop.f32.mrf.mxu0
    %732 = vdwg.mxu0
    %v733 = vmax.f32 %v627, %v727
    %v734 = vmax.f32 %v628, %v730
    %735 = vrot.lane.b32.xlu0 %v643, 64
    %v736 = vpop.permute.xlu0 %735
    %737 = vrot.lane.b32.xlu0 %v644, 64
    %v738 = vpop.permute.xlu0 %737
    %739 = vrot.lane.b32.xlu0 %v645, 64
    %v740 = vpop.permute.xlu0 %739
    %v741 = vsel %vm334, %v736, %v738
    %v742 = vsel %vm334, %v738, %v740
    %v746 = vsel %vm242, %v740, 0
    %748 = vmatprep.subr.bf16.mxu0 0
    %749 = vmatpush1.bf16.msra.mxu0 %v209
    %750 = vmatprep.subr.bf16.mxu0 0
    %751 = vmatpush1.bf16.msra.mxu0 %v208
    %752 = vmatprep.subr.bf16.mxu0 0
    %753 = vmatpush1.bf16.msra.mxu0 %v207
    %754 = vmatprep.subr.bf16.mxu0 0
    %755 = vmatpush1.bf16.msra.mxu0 %v206
    %756 = vmatprep.subr.bf16.mxu0 0
    %757 = vmatpush1.bf16.msra.mxu0 %v205
    %758 = vmatprep.subr.bf16.mxu0 0
    %759 = vmatpush1.bf16.msra.mxu0 %v204
    %760 = vmatprep.subr.bf16.mxu0 0
    %761 = vmatpush1.bf16.msra.mxu0 %v203
    %762 = vmatprep.subr.bf16.mxu0 0
    %763 = vmatpush1.bf16.msra.mxu0 %v202
    %764 = vmatprep.subr.bf16.mxu0 0
    %765 = vmatpush2.bf16.msra.mxu0 %v217
    %766 = vmatprep.subr.bf16.mxu0 0
    %767 = vmatpush2.bf16.msra.mxu0 %v216
    %768 = vmatprep.subr.bf16.mxu0 0
    %769 = vmatpush2.bf16.msra.mxu0 %v215
    %770 = vmatprep.subr.bf16.mxu0 0
    %771 = vmatpush2.bf16.msra.mxu0 %v214
    %772 = vmatprep.subr.bf16.mxu0 0
    %773 = vmatpush2.bf16.msra.mxu0 %v213
    %774 = vmatprep.subr.bf16.mxu0 0
    %775 = vmatpush2.bf16.msra.mxu0 %v212
    %776 = vmatprep.subr.bf16.mxu0 0
    %777 = vmatpush2.bf16.msra.mxu0 %v211
    %778 = vmatprep.subr.bf16.mxu0 0
    %779 = vmatpush2.bf16.msra.mxu0 %v210
    %780 = vmatprep.mubr.bf16.mxu0 %v742
    %781 = vmatmul.mubr.bf16.gmra.mxu0 %v741
    %v782 = vpop.f32.mrf.mxu0
    %v783 = vadd.f32 0.0, %v782
    %v784 = vpop.f32.mrf.mxu0
    %v785 = vpop.f32.mrf.mxu0
    %v786 = vadd.f32 0.0, %v785
    %v787 = vpop.f32.mrf.mxu0
    %788 = vdwg.mxu0
    %789 = vmatprep.subr.bf16.mxu0 0
    %790 = vmatpush1.bf16.msra.mxu0 0
    %791 = vmatprep.subr.bf16.mxu0 0
    %792 = vmatpush1.bf16.msra.mxu0 0
    %793 = vmatprep.subr.bf16.mxu0 0
    %794 = vmatpush1.bf16.msra.mxu0 0
    %795 = vmatprep.subr.bf16.mxu0 0
    %796 = vmatpush1.bf16.msra.mxu0 0
    %797 = vmatprep.subr.bf16.mxu0 0
    %798 = vmatpush1.bf16.msra.mxu0 %v221
    %799 = vmatprep.subr.bf16.mxu0 0
    %800 = vmatpush1.bf16.msra.mxu0 %v220
    %801 = vmatprep.subr.bf16.mxu0 0
    %802 = vmatpush1.bf16.msra.mxu0 %v219
    %803 = vmatprep.subr.bf16.mxu0 0
    %804 = vmatpush1.bf16.msra.mxu0 %v218
    %805 = vmatprep.subr.bf16.mxu0 0
    %806 = vmatpush2.bf16.msra.mxu0 0
    %807 = vmatprep.subr.bf16.mxu0 0
    %808 = vmatpush2.bf16.msra.mxu0 0
    %809 = vmatprep.subr.bf16.mxu0 0
    %810 = vmatpush2.bf16.msra.mxu0 0
    %811 = vmatprep.subr.bf16.mxu0 0
    %812 = vmatpush2.bf16.msra.mxu0 0
    %813 = vmatprep.subr.bf16.mxu0 0
    %814 = vmatpush2.bf16.msra.mxu0 0
    %815 = vmatprep.subr.bf16.mxu0 0
    %816 = vmatpush2.bf16.msra.mxu0 0
    %817 = vmatprep.subr.bf16.mxu0 0
    %818 = vmatpush2.bf16.msra.mxu0 0
    %819 = vmatprep.subr.bf16.mxu0 0
    %820 = vmatpush2.bf16.msra.mxu0 0
    %821 = vmatprep.mubr.bf16.mxu0 0
    %822 = vmatmul.mubr.bf16.gmra.mxu0 %v746
    %v823 = vpop.f32.mrf.mxu0
    %v824 = vadd.f32 %v783, %v823
    %v825 = vpop.f32.mrf.mxu0
    %v826 = vpop.f32.mrf.mxu0
    %v827 = vadd.f32 %v786, %v826
    %v828 = vpop.f32.mrf.mxu0
    %829 = vdwg.mxu0
    %v830 = vmax.f32 %v733, %v824
    %v831 = vmax.f32 %v734, %v827
    %v832 = vld [vmem:[#allocation2 + $0xc] sm:$0xff]
    %v833 = vld [vmem:[#allocation2 + $0x14] sm:$0xf]
    %v834 = vld [vmem:[#allocation2 + $0x2c] sm:$0xff]
    %v835 = vld [vmem:[#allocation2 + $0x34] sm:$0xf]
    %v840 = vunpack.c.l.b16 %v832
    %v841 = vunpack.c.h.b16 %v832
    %v842 = vunpack.c.l.b16 %v833
    %v843 = vunpack.c.l.b16 %v834
    %v844 = vunpack.c.h.b16 %v834
    %v845 = vunpack.c.l.b16 %v835
    %v846 = vpack.c.b16 %v843, %v840
    %v847 = vpack.c.b16 %v844, %v841
    %v848 = vpack.c.b16 %v845, %v842
    %v852 = vsel %vm242, %v848, 0
    %854 = vmatprep.subr.bf16.mxu0 0
    %855 = vmatpush1.bf16.msra.mxu0 %v209
    %856 = vmatprep.subr.bf16.mxu0 0
    %857 = vmatpush1.bf16.msra.mxu0 %v208
    %858 = vmatprep.subr.bf16.mxu0 0
    %859 = vmatpush1.bf16.msra.mxu0 %v207
    %860 = vmatprep.subr.bf16.mxu0 0
    %861 = vmatpush1.bf16.msra.mxu0 %v206
    %862 = vmatprep.subr.bf16.mxu0 0
    %863 = vmatpush1.bf16.msra.mxu0 %v205
    %864 = vmatprep.subr.bf16.mxu0 0
    %865 = vmatpush1.bf16.msra.mxu0 %v204
    %866 = vmatprep.subr.bf16.mxu0 0
    %867 = vmatpush1.bf16.msra.mxu0 %v203
    %868 = vmatprep.subr.bf16.mxu0 0
    %869 = vmatpush1.bf16.msra.mxu0 %v202
    %870 = vmatprep.subr.bf16.mxu0 0
    %871 = vmatpush2.bf16.msra.mxu0 %v217
    %872 = vmatprep.subr.bf16.mxu0 0
    %873 = vmatpush2.bf16.msra.mxu0 %v216
    %874 = vmatprep.subr.bf16.mxu0 0
    %875 = vmatpush2.bf16.msra.mxu0 %v215
    %876 = vmatprep.subr.bf16.mxu0 0
    %877 = vmatpush2.bf16.msra.mxu0 %v214
    %878 = vmatprep.subr.bf16.mxu0 0
    %879 = vmatpush2.bf16.msra.mxu0 %v213
    %880 = vmatprep.subr.bf16.mxu0 0
    %881 = vmatpush2.bf16.msra.mxu0 %v212
    %882 = vmatprep.subr.bf16.mxu0 0
    %883 = vmatpush2.bf16.msra.mxu0 %v211
    %884 = vmatprep.subr.bf16.mxu0 0
    %885 = vmatpush2.bf16.msra.mxu0 %v210
    %886 = vmatprep.mubr.bf16.mxu0 %v847
    %887 = vmatmul.mubr.bf16.gmra.mxu0 %v846
    %v888 = vpop.f32.mrf.mxu0
    %v889 = vadd.f32 0.0, %v888
    %v890 = vpop.f32.mrf.mxu0
    %v891 = vpop.f32.mrf.mxu0
    %v892 = vadd.f32 0.0, %v891
    %v893 = vpop.f32.mrf.mxu0
    %894 = vdwg.mxu0
    %895 = vmatprep.subr.bf16.mxu0 0
    %896 = vmatpush1.bf16.msra.mxu0 0
    %897 = vmatprep.subr.bf16.mxu0 0
    %898 = vmatpush1.bf16.msra.mxu0 0
    %899 = vmatprep.subr.bf16.mxu0 0
    %900 = vmatpush1.bf16.msra.mxu0 0
    %901 = vmatprep.subr.bf16.mxu0 0
    %902 = vmatpush1.bf16.msra.mxu0 0
    %903 = vmatprep.subr.bf16.mxu0 0
    %904 = vmatpush1.bf16.msra.mxu0 %v221
    %905 = vmatprep.subr.bf16.mxu0 0
    %906 = vmatpush1.bf16.msra.mxu0 %v220
    %907 = vmatprep.subr.bf16.mxu0 0
    %908 = vmatpush1.bf16.msra.mxu0 %v219
    %909 = vmatprep.subr.bf16.mxu0 0
    %910 = vmatpush1.bf16.msra.mxu0 %v218
    %911 = vmatprep.subr.bf16.mxu0 0
    %912 = vmatpush2.bf16.msra.mxu0 0
    %913 = vmatprep.subr.bf16.mxu0 0
    %914 = vmatpush2.bf16.msra.mxu0 0
    %915 = vmatprep.subr.bf16.mxu0 0
    %916 = vmatpush2.bf16.msra.mxu0 0
    %917 = vmatprep.subr.bf16.mxu0 0
    %918 = vmatpush2.bf16.msra.mxu0 0
    %919 = vmatprep.subr.bf16.mxu0 0
    %920 = vmatpush2.bf16.msra.mxu0 0
    %921 = vmatprep.subr.bf16.mxu0 0
    %922 = vmatpush2.bf16.msra.mxu0 0
    %923 = vmatprep.subr.bf16.mxu0 0
    %924 = vmatpush2.bf16.msra.mxu0 0
    %925 = vmatprep.subr.bf16.mxu0 0
    %926 = vmatpush2.bf16.msra.mxu0 0
    %927 = vmatprep.mubr.bf16.mxu0 0
    %928 = vmatmul.mubr.bf16.gmra.mxu0 %v852
    %v929 = vpop.f32.mrf.mxu0
    %v930 = vadd.f32 %v889, %v929
    %v931 = vpop.f32.mrf.mxu0
    %v932 = vpop.f32.mrf.mxu0
    %v933 = vadd.f32 %v892, %v932
    %v934 = vpop.f32.mrf.mxu0
    %935 = vdwg.mxu0
    %v936 = vmax.f32 %v830, %v930
    %v937 = vmax.f32 %v831, %v933
    %938 = vrot.lane.b32.xlu0 %v846, 64
    %v939 = vpop.permute.xlu0 %938
    %940 = vrot.lane.b32.xlu0 %v847, 64
    %v941 = vpop.permute.xlu0 %940
    %942 = vrot.lane.b32.xlu0 %v848, 64
    %v943 = vpop.permute.xlu0 %942
    %v944 = vsel %vm334, %v939, %v941
    %v945 = vsel %vm334, %v941, %v943
    %v949 = vsel %vm242, %v943, 0
    %951 = vmatprep.subr.bf16.mxu0 0
    %952 = vmatpush1.bf16.msra.mxu0 %v209
    %953 = vmatprep.subr.bf16.mxu0 0
    %954 = vmatpush1.bf16.msra.mxu0 %v208
    %955 = vmatprep.subr.bf16.mxu0 0
    %956 = vmatpush1.bf16.msra.mxu0 %v207
    %957 = vmatprep.subr.bf16.mxu0 0
    %958 = vmatpush1.bf16.msra.mxu0 %v206
    %959 = vmatprep.subr.bf16.mxu0 0
    %960 = vmatpush1.bf16.msra.mxu0 %v205
    %961 = vmatprep.subr.bf16.mxu0 0
    %962 = vmatpush1.bf16.msra.mxu0 %v204
    %963 = vmatprep.subr.bf16.mxu0 0
    %964 = vmatpush1.bf16.msra.mxu0 %v203
    %965 = vmatprep.subr.bf16.mxu0 0
    %966 = vmatpush1.bf16.msra.mxu0 %v202
    %967 = vmatprep.subr.bf16.mxu0 0
    %968 = vmatpush2.bf16.msra.mxu0 %v217
    %969 = vmatprep.subr.bf16.mxu0 0
    %970 = vmatpush2.bf16.msra.mxu0 %v216
    %971 = vmatprep.subr.bf16.mxu0 0
    %972 = vmatpush2.bf16.msra.mxu0 %v215
    %973 = vmatprep.subr.bf16.mxu0 0
    %974 = vmatpush2.bf16.msra.mxu0 %v214
    %975 = vmatprep.subr.bf16.mxu0 0
    %976 = vmatpush2.bf16.msra.mxu0 %v213
    %977 = vmatprep.subr.bf16.mxu0 0
    %978 = vmatpush2.bf16.msra.mxu0 %v212
    %979 = vmatprep.subr.bf16.mxu0 0
    %980 = vmatpush2.bf16.msra.mxu0 %v211
    %981 = vmatprep.subr.bf16.mxu0 0
    %982 = vmatpush2.bf16.msra.mxu0 %v210
    %983 = vmatprep.mubr.bf16.mxu0 %v945
    %984 = vmatmul.mubr.bf16.gmra.mxu0 %v944
    %v985 = vpop.f32.mrf.mxu0
    %v986 = vadd.f32 0.0, %v985
    %v987 = vpop.f32.mrf.mxu0
    %v988 = vpop.f32.mrf.mxu0
    %v989 = vadd.f32 0.0, %v988
    %v990 = vpop.f32.mrf.mxu0
    %991 = vdwg.mxu0
    %992 = vmatprep.subr.bf16.mxu0 0
    %993 = vmatpush1.bf16.msra.mxu0 0
    %994 = vmatprep.subr.bf16.mxu0 0
    %995 = vmatpush1.bf16.msra.mxu0 0
    %996 = vmatprep.subr.bf16.mxu0 0
    %997 = vmatpush1.bf16.msra.mxu0 0
    %998 = vmatprep.subr.bf16.mxu0 0
    %999 = vmatpush1.bf16.msra.mxu0 0
    %1000 = vmatprep.subr.bf16.mxu0 0
    %1001 = vmatpush1.bf16.msra.mxu0 %v221
    %1002 = vmatprep.subr.bf16.mxu0 0
    %1003 = vmatpush1.bf16.msra.mxu0 %v220
    %1004 = vmatprep.subr.bf16.mxu0 0
    %1005 = vmatpush1.bf16.msra.mxu0 %v219
    %1006 = vmatprep.subr.bf16.mxu0 0
    %1007 = vmatpush1.bf16.msra.mxu0 %v218
    %1008 = vmatprep.subr.bf16.mxu0 0
    %1009 = vmatpush2.bf16.msra.mxu0 0
    %1010 = vmatprep.subr.bf16.mxu0 0
    %1011 = vmatpush2.bf16.msra.mxu0 0
    %1012 = vmatprep.subr.bf16.mxu0 0
    %1013 = vmatpush2.bf16.msra.mxu0 0
    %1014 = vmatprep.subr.bf16.mxu0 0
    %1015 = vmatpush2.bf16.msra.mxu0 0
    %1016 = vmatprep.subr.bf16.mxu0 0
    %1017 = vmatpush2.bf16.msra.mxu0 0
    %1018 = vmatprep.subr.bf16.mxu0 0
    %1019 = vmatpush2.bf16.msra.mxu0 0
    %1020 = vmatprep.subr.bf16.mxu0 0
    %1021 = vmatpush2.bf16.msra.mxu0 0
    %1022 = vmatprep.subr.bf16.mxu0 0
    %1023 = vmatpush2.bf16.msra.mxu0 0
    %1024 = vmatprep.mubr.bf16.mxu0 0
    %1025 = vmatmul.mubr.bf16.gmra.mxu0 %v949
    %v1026 = vpop.f32.mrf.mxu0
    %v1027 = vadd.f32 %v986, %v1026
    %v1028 = vpop.f32.mrf.mxu0
    %v1029 = vpop.f32.mrf.mxu0
    %v1030 = vadd.f32 %v989, %v1029
    %v1031 = vpop.f32.mrf.mxu0
    %1032 = vdwg.mxu0
    %v1033 = vmax.f32 %v936, %v1027
    %v1034 = vmax.f32 %v937, %v1030
    %v1035 = vld [vmem:[#allocation2 + $0x10] sm:$0xff]
    %v1036 = vld [vmem:[#allocation2 + $0x18] sm:$0xf]
    %v1037 = vld [vmem:[#allocation2 + $0x30] sm:$0xff]
    %v1038 = vld [vmem:[#allocation2 + $0x38] sm:$0xf]
    %v1043 = vunpack.c.l.b16 %v1035
    %v1044 = vunpack.c.h.b16 %v1035
    %v1045 = vunpack.c.l.b16 %v1036
    %v1046 = vunpack.c.l.b16 %v1037
    %v1047 = vunpack.c.h.b16 %v1037
    %v1048 = vunpack.c.l.b16 %v1038
    %v1049 = vpack.c.b16 %v1046, %v1043
    %v1050 = vpack.c.b16 %v1047, %v1044
    %v1051 = vpack.c.b16 %v1048, %v1045
    %v1055 = vsel %vm242, %v1051, 0
    %1057 = vmatprep.subr.bf16.mxu0 0
    %1058 = vmatpush1.bf16.msra.mxu0 %v209
    %1059 = vmatprep.subr.bf16.mxu0 0
    %1060 = vmatpush1.bf16.msra.mxu0 %v208
    %1061 = vmatprep.subr.bf16.mxu0 0
    %1062 = vmatpush1.bf16.msra.mxu0 %v207
    %1063 = vmatprep.subr.bf16.mxu0 0
    %1064 = vmatpush1.bf16.msra.mxu0 %v206
    %1065 = vmatprep.subr.bf16.mxu0 0
    %1066 = vmatpush1.bf16.msra.mxu0 %v205
    %1067 = vmatprep.subr.bf16.mxu0 0
    %1068 = vmatpush1.bf16.msra.mxu0 %v204
    %1069 = vmatprep.subr.bf16.mxu0 0
    %1070 = vmatpush1.bf16.msra.mxu0 %v203
    %1071 = vmatprep.subr.bf16.mxu0 0
    %1072 = vmatpush1.bf16.msra.mxu0 %v202
    %1073 = vmatprep.subr.bf16.mxu0 0
    %1074 = vmatpush2.bf16.msra.mxu0 %v217
    %1075 = vmatprep.subr.bf16.mxu0 0
    %1076 = vmatpush2.bf16.msra.mxu0 %v216
    %1077 = vmatprep.subr.bf16.mxu0 0
    %1078 = vmatpush2.bf16.msra.mxu0 %v215
    %1079 = vmatprep.subr.bf16.mxu0 0
    %1080 = vmatpush2.bf16.msra.mxu0 %v214
    %1081 = vmatprep.subr.bf16.mxu0 0
    %1082 = vmatpush2.bf16.msra.mxu0 %v213
    %1083 = vmatprep.subr.bf16.mxu0 0
    %1084 = vmatpush2.bf16.msra.mxu0 %v212
    %1085 = vmatprep.subr.bf16.mxu0 0
    %1086 = vmatpush2.bf16.msra.mxu0 %v211
    %1087 = vmatprep.subr.bf16.mxu0 0
    %1088 = vmatpush2.bf16.msra.mxu0 %v210
    %1089 = vmatprep.mubr.bf16.mxu0 %v1050
    %1090 = vmatmul.mubr.bf16.gmra.mxu0 %v1049
    %v1091 = vpop.f32.mrf.mxu0
    %v1092 = vadd.f32 0.0, %v1091
    %v1093 = vpop.f32.mrf.mxu0
    %v1094 = vpop.f32.mrf.mxu0
    %v1095 = vadd.f32 0.0, %v1094
    %v1096 = vpop.f32.mrf.mxu0
    %1097 = vdwg.mxu0
    %1098 = vmatprep.subr.bf16.mxu0 0
    %1099 = vmatpush1.bf16.msra.mxu0 0
    %1100 = vmatprep.subr.bf16.mxu0 0
    %1101 = vmatpush1.bf16.msra.mxu0 0
    %1102 = vmatprep.subr.bf16.mxu0 0
    %1103 = vmatpush1.bf16.msra.mxu0 0
    %1104 = vmatprep.subr.bf16.mxu0 0
    %1105 = vmatpush1.bf16.msra.mxu0 0
    %1106 = vmatprep.subr.bf16.mxu0 0
    %1107 = vmatpush1.bf16.msra.mxu0 %v221
    %1108 = vmatprep.subr.bf16.mxu0 0
    %1109 = vmatpush1.bf16.msra.mxu0 %v220
    %1110 = vmatprep.subr.bf16.mxu0 0
    %1111 = vmatpush1.bf16.msra.mxu0 %v219
    %1112 = vmatprep.subr.bf16.mxu0 0
    %1113 = vmatpush1.bf16.msra.mxu0 %v218
    %1114 = vmatprep.subr.bf16.mxu0 0
    %1115 = vmatpush2.bf16.msra.mxu0 0
    %1116 = vmatprep.subr.bf16.mxu0 0
    %1117 = vmatpush2.bf16.msra.mxu0 0
    %1118 = vmatprep.subr.bf16.mxu0 0
    %1119 = vmatpush2.bf16.msra.mxu0 0
    %1120 = vmatprep.subr.bf16.mxu0 0
    %1121 = vmatpush2.bf16.msra.mxu0 0
    %1122 = vmatprep.subr.bf16.mxu0 0
    %1123 = vmatpush2.bf16.msra.mxu0 0
    %1124 = vmatprep.subr.bf16.mxu0 0
    %1125 = vmatpush2.bf16.msra.mxu0 0
    %1126 = vmatprep.subr.bf16.mxu0 0
    %1127 = vmatpush2.bf16.msra.mxu0 0
    %1128 = vmatprep.subr.bf16.mxu0 0
    %1129 = vmatpush2.bf16.msra.mxu0 0
    %1130 = vmatprep.mubr.bf16.mxu0 0
    %1131 = vmatmul.mubr.bf16.gmra.mxu0 %v1055
    %v1132 = vpop.f32.mrf.mxu0
    %v1133 = vadd.f32 %v1092, %v1132
    %v1134 = vpop.f32.mrf.mxu0
    %v1135 = vpop.f32.mrf.mxu0
    %v1136 = vadd.f32 %v1095, %v1135
    %v1137 = vpop.f32.mrf.mxu0
    %1138 = vdwg.mxu0
    %v1139 = vmax.f32 %v1033, %v1133
    %v1140 = vmax.f32 %v1034, %v1136
    %1141 = vrot.lane.b32.xlu0 %v1049, 64
    %v1142 = vpop.permute.xlu0 %1141
    %1143 = vrot.lane.b32.xlu0 %v1050, 64
    %v1144 = vpop.permute.xlu0 %1143
    %1145 = vrot.lane.b32.xlu0 %v1051, 64
    %v1146 = vpop.permute.xlu0 %1145
    %v1147 = vsel %vm334, %v1142, %v1144
    %v1148 = vsel %vm334, %v1144, %v1146
    %v1152 = vsel %vm242, %v1146, 0
    %1154 = vmatprep.subr.bf16.mxu0 0
    %1155 = vmatpush1.bf16.msra.mxu0 %v209
    %1156 = vmatprep.subr.bf16.mxu0 0
    %1157 = vmatpush1.bf16.msra.mxu0 %v208
    %1158 = vmatprep.subr.bf16.mxu0 0
    %1159 = vmatpush1.bf16.msra.mxu0 %v207
    %1160 = vmatprep.subr.bf16.mxu0 0
    %1161 = vmatpush1.bf16.msra.mxu0 %v206
    %1162 = vmatprep.subr.bf16.mxu0 0
    %1163 = vmatpush1.bf16.msra.mxu0 %v205
    %1164 = vmatprep.subr.bf16.mxu0 0
    %1165 = vmatpush1.bf16.msra.mxu0 %v204
    %1166 = vmatprep.subr.bf16.mxu0 0
    %1167 = vmatpush1.bf16.msra.mxu0 %v203
    %1168 = vmatprep.subr.bf16.mxu0 0
    %1169 = vmatpush1.bf16.msra.mxu0 %v202
    %1170 = vmatprep.subr.bf16.mxu0 0
    %1171 = vmatpush2.bf16.msra.mxu0 %v217
    %1172 = vmatprep.subr.bf16.mxu0 0
    %1173 = vmatpush2.bf16.msra.mxu0 %v216
    %1174 = vmatprep.subr.bf16.mxu0 0
    %1175 = vmatpush2.bf16.msra.mxu0 %v215
    %1176 = vmatprep.subr.bf16.mxu0 0
    %1177 = vmatpush2.bf16.msra.mxu0 %v214
    %1178 = vmatprep.subr.bf16.mxu0 0
    %1179 = vmatpush2.bf16.msra.mxu0 %v213
    %1180 = vmatprep.subr.bf16.mxu0 0
    %1181 = vmatpush2.bf16.msra.mxu0 %v212
    %1182 = vmatprep.subr.bf16.mxu0 0
    %1183 = vmatpush2.bf16.msra.mxu0 %v211
    %1184 = vmatprep.subr.bf16.mxu0 0
    %1185 = vmatpush2.bf16.msra.mxu0 %v210
    %1186 = vmatprep.mubr.bf16.mxu0 %v1148
    %1187 = vmatmul.mubr.bf16.gmra.mxu0 %v1147
    %v1188 = vpop.f32.mrf.mxu0
    %v1189 = vadd.f32 0.0, %v1188
    %v1190 = vpop.f32.mrf.mxu0
    %v1191 = vpop.f32.mrf.mxu0
    %v1192 = vadd.f32 0.0, %v1191
    %v1193 = vpop.f32.mrf.mxu0
    %1194 = vdwg.mxu0
    %1195 = vmatprep.subr.bf16.mxu0 0
    %1196 = vmatpush1.bf16.msra.mxu0 0
    %1197 = vmatprep.subr.bf16.mxu0 0
    %1198 = vmatpush1.bf16.msra.mxu0 0
    %1199 = vmatprep.subr.bf16.mxu0 0
    %1200 = vmatpush1.bf16.msra.mxu0 0
    %1201 = vmatprep.subr.bf16.mxu0 0
    %1202 = vmatpush1.bf16.msra.mxu0 0
    %1203 = vmatprep.subr.bf16.mxu0 0
    %1204 = vmatpush1.bf16.msra.mxu0 %v221
    %1205 = vmatprep.subr.bf16.mxu0 0
    %1206 = vmatpush1.bf16.msra.mxu0 %v220
    %1207 = vmatprep.subr.bf16.mxu0 0
    %1208 = vmatpush1.bf16.msra.mxu0 %v219
    %1209 = vmatprep.subr.bf16.mxu0 0
    %1210 = vmatpush1.bf16.msra.mxu0 %v218
    %1211 = vmatprep.subr.bf16.mxu0 0
    %1212 = vmatpush2.bf16.msra.mxu0 0
    %1213 = vmatprep.subr.bf16.mxu0 0
    %1214 = vmatpush2.bf16.msra.mxu0 0
    %1215 = vmatprep.subr.bf16.mxu0 0
    %1216 = vmatpush2.bf16.msra.mxu0 0
    %1217 = vmatprep.subr.bf16.mxu0 0
    %1218 = vmatpush2.bf16.msra.mxu0 0
    %1219 = vmatprep.subr.bf16.mxu0 0
    %1220 = vmatpush2.bf16.msra.mxu0 0
    %1221 = vmatprep.subr.bf16.mxu0 0
    %1222 = vmatpush2.bf16.msra.mxu0 0
    %1223 = vmatprep.subr.bf16.mxu0 0
    %1224 = vmatpush2.bf16.msra.mxu0 0
    %1225 = vmatprep.subr.bf16.mxu0 0
    %1226 = vmatpush2.bf16.msra.mxu0 0
    %1227 = vmatprep.mubr.bf16.mxu0 0
    %1228 = vmatmul.mubr.bf16.gmra.mxu0 %v1152
    %v1229 = vpop.f32.mrf.mxu0
    %v1230 = vadd.f32 %v1189, %v1229
    %v1231 = vpop.f32.mrf.mxu0
    %v1232 = vpop.f32.mrf.mxu0
    %v1233 = vadd.f32 %v1192, %v1232
    %v1234 = vpop.f32.mrf.mxu0
    %1235 = vdwg.mxu0
    %v1236 = vmax.f32 %v1139, %v1230
    %v1237 = vmax.f32 %v1140, %v1233
    %v1238 = vld [vmem:[#allocation2 + $0x14] sm:$0xff]
    %v1239 = vld [vmem:[#allocation2 + $0x1c] sm:$0xf]
    %v1240 = vld [vmem:[#allocation2 + $0x34] sm:$0xff]
    %v1241 = vld [vmem:[#allocation2 + $0x3c] sm:$0xf]
    %v1246 = vunpack.c.l.b16 %v1238
    %v1247 = vunpack.c.h.b16 %v1238
    %v1248 = vunpack.c.l.b16 %v1239
    %v1249 = vunpack.c.l.b16 %v1240
    %v1250 = vunpack.c.h.b16 %v1240
    %v1251 = vunpack.c.l.b16 %v1241
    %v1252 = vpack.c.b16 %v1249, %v1246
    %v1253 = vpack.c.b16 %v1250, %v1247
    %v1254 = vpack.c.b16 %v1251, %v1248
    %v1258 = vsel %vm242, %v1254, 0
    %1260 = vmatprep.subr.bf16.mxu0 0
    %1261 = vmatpush1.bf16.msra.mxu0 %v209
    %1262 = vmatprep.subr.bf16.mxu0 0
    %1263 = vmatpush1.bf16.msra.mxu0 %v208
    %1264 = vmatprep.subr.bf16.mxu0 0
    %1265 = vmatpush1.bf16.msra.mxu0 %v207
    %1266 = vmatprep.subr.bf16.mxu0 0
    %1267 = vmatpush1.bf16.msra.mxu0 %v206
    %1268 = vmatprep.subr.bf16.mxu0 0
    %1269 = vmatpush1.bf16.msra.mxu0 %v205
    %1270 = vmatprep.subr.bf16.mxu0 0
    %1271 = vmatpush1.bf16.msra.mxu0 %v204
    %1272 = vmatprep.subr.bf16.mxu0 0
    %1273 = vmatpush1.bf16.msra.mxu0 %v203
    %1274 = vmatprep.subr.bf16.mxu0 0
    %1275 = vmatpush1.bf16.msra.mxu0 %v202
    %1276 = vmatprep.subr.bf16.mxu0 0
    %1277 = vmatpush2.bf16.msra.mxu0 %v217
    %1278 = vmatprep.subr.bf16.mxu0 0
    %1279 = vmatpush2.bf16.msra.mxu0 %v216
    %1280 = vmatprep.subr.bf16.mxu0 0
    %1281 = vmatpush2.bf16.msra.mxu0 %v215
    %1282 = vmatprep.subr.bf16.mxu0 0
    %1283 = vmatpush2.bf16.msra.mxu0 %v214
    %1284 = vmatprep.subr.bf16.mxu0 0
    %1285 = vmatpush2.bf16.msra.mxu0 %v213
    %1286 = vmatprep.subr.bf16.mxu0 0
    %1287 = vmatpush2.bf16.msra.mxu0 %v212
    %1288 = vmatprep.subr.bf16.mxu0 0
    %1289 = vmatpush2.bf16.msra.mxu0 %v211
    %1290 = vmatprep.subr.bf16.mxu0 0
    %1291 = vmatpush2.bf16.msra.mxu0 %v210
    %1292 = vmatprep.mubr.bf16.mxu0 %v1253
    %1293 = vmatmul.mubr.bf16.gmra.mxu0 %v1252
    %v1294 = vpop.f32.mrf.mxu0
    %v1295 = vadd.f32 0.0, %v1294
    %v1296 = vpop.f32.mrf.mxu0
    %v1297 = vpop.f32.mrf.mxu0
    %v1298 = vadd.f32 0.0, %v1297
    %v1299 = vpop.f32.mrf.mxu0
    %1300 = vdwg.mxu0
    %1301 = vmatprep.subr.bf16.mxu0 0
    %1302 = vmatpush1.bf16.msra.mxu0 0
    %1303 = vmatprep.subr.bf16.mxu0 0
    %1304 = vmatpush1.bf16.msra.mxu0 0
    %1305 = vmatprep.subr.bf16.mxu0 0
    %1306 = vmatpush1.bf16.msra.mxu0 0
    %1307 = vmatprep.subr.bf16.mxu0 0
    %1308 = vmatpush1.bf16.msra.mxu0 0
    %1309 = vmatprep.subr.bf16.mxu0 0
    %1310 = vmatpush1.bf16.msra.mxu0 %v221
    %1311 = vmatprep.subr.bf16.mxu0 0
    %1312 = vmatpush1.bf16.msra.mxu0 %v220
    %1313 = vmatprep.subr.bf16.mxu0 0
    %1314 = vmatpush1.bf16.msra.mxu0 %v219
    %1315 = vmatprep.subr.bf16.mxu0 0
    %1316 = vmatpush1.bf16.msra.mxu0 %v218
    %1317 = vmatprep.subr.bf16.mxu0 0
    %1318 = vmatpush2.bf16.msra.mxu0 0
    %1319 = vmatprep.subr.bf16.mxu0 0
    %1320 = vmatpush2.bf16.msra.mxu0 0
    %1321 = vmatprep.subr.bf16.mxu0 0
    %1322 = vmatpush2.bf16.msra.mxu0 0
    %1323 = vmatprep.subr.bf16.mxu0 0
    %1324 = vmatpush2.bf16.msra.mxu0 0
    %1325 = vmatprep.subr.bf16.mxu0 0
    %1326 = vmatpush2.bf16.msra.mxu0 0
    %1327 = vmatprep.subr.bf16.mxu0 0
    %1328 = vmatpush2.bf16.msra.mxu0 0
    %1329 = vmatprep.subr.bf16.mxu0 0
    %1330 = vmatpush2.bf16.msra.mxu0 0
    %1331 = vmatprep.subr.bf16.mxu0 0
    %1332 = vmatpush2.bf16.msra.mxu0 0
    %1333 = vmatprep.mubr.bf16.mxu0 0
    %1334 = vmatmul.mubr.bf16.gmra.mxu0 %v1258
    %v1335 = vpop.f32.mrf.mxu0
    %v1336 = vadd.f32 %v1295, %v1335
    %v1337 = vpop.f32.mrf.mxu0
    %v1338 = vpop.f32.mrf.mxu0
    %v1339 = vadd.f32 %v1298, %v1338
    %v1340 = vpop.f32.mrf.mxu0
    %1341 = vdwg.mxu0
    %v1342 = vmax.f32 %v1236, %v1336
    %v1343 = vmax.f32 %v1237, %v1339
    %1344 = vrot.lane.b32.xlu0 %v1252, 64
    %v1345 = vpop.permute.xlu0 %1344
    %1346 = vrot.lane.b32.xlu0 %v1253, 64
    %v1347 = vpop.permute.xlu0 %1346
    %1348 = vrot.lane.b32.xlu0 %v1254, 64
    %v1349 = vpop.permute.xlu0 %1348
    %v1350 = vsel %vm334, %v1345, %v1347
    %v1351 = vsel %vm334, %v1347, %v1349
    %v1355 = vsel %vm242, %v1349, 0
    %1357 = vmatprep.subr.bf16.mxu0 0
    %1358 = vmatpush1.bf16.msra.mxu0 %v209
    %1359 = vmatprep.subr.bf16.mxu0 0
    %1360 = vmatpush1.bf16.msra.mxu0 %v208
    %1361 = vmatprep.subr.bf16.mxu0 0
    %1362 = vmatpush1.bf16.msra.mxu0 %v207
    %1363 = vmatprep.subr.bf16.mxu0 0
    %1364 = vmatpush1.bf16.msra.mxu0 %v206
    %1365 = vmatprep.subr.bf16.mxu0 0
    %1366 = vmatpush1.bf16.msra.mxu0 %v205
    %1367 = vmatprep.subr.bf16.mxu0 0
    %1368 = vmatpush1.bf16.msra.mxu0 %v204
    %1369 = vmatprep.subr.bf16.mxu0 0
    %1370 = vmatpush1.bf16.msra.mxu0 %v203
    %1371 = vmatprep.subr.bf16.mxu0 0
    %1372 = vmatpush1.bf16.msra.mxu0 %v202
    %1373 = vmatprep.subr.bf16.mxu0 0
    %1374 = vmatpush2.bf16.msra.mxu0 %v217
    %1375 = vmatprep.subr.bf16.mxu0 0
    %1376 = vmatpush2.bf16.msra.mxu0 %v216
    %1377 = vmatprep.subr.bf16.mxu0 0
    %1378 = vmatpush2.bf16.msra.mxu0 %v215
    %1379 = vmatprep.subr.bf16.mxu0 0
    %1380 = vmatpush2.bf16.msra.mxu0 %v214
    %1381 = vmatprep.subr.bf16.mxu0 0
    %1382 = vmatpush2.bf16.msra.mxu0 %v213
    %1383 = vmatprep.subr.bf16.mxu0 0
    %1384 = vmatpush2.bf16.msra.mxu0 %v212
    %1385 = vmatprep.subr.bf16.mxu0 0
    %1386 = vmatpush2.bf16.msra.mxu0 %v211
    %1387 = vmatprep.subr.bf16.mxu0 0
    %1388 = vmatpush2.bf16.msra.mxu0 %v210
    %1389 = vmatprep.mubr.bf16.mxu0 %v1351
    %1390 = vmatmul.mubr.bf16.gmra.mxu0 %v1350
    %v1391 = vpop.f32.mrf.mxu0
    %v1392 = vadd.f32 0.0, %v1391
    %v1393 = vpop.f32.mrf.mxu0
    %v1394 = vpop.f32.mrf.mxu0
    %v1395 = vadd.f32 0.0, %v1394
    %v1396 = vpop.f32.mrf.mxu0
    %1397 = vdwg.mxu0
    %1398 = vmatprep.subr.bf16.mxu0 0
    %1399 = vmatpush1.bf16.msra.mxu0 0
    %1400 = vmatprep.subr.bf16.mxu0 0
    %1401 = vmatpush1.bf16.msra.mxu0 0
    %1402 = vmatprep.subr.bf16.mxu0 0
    %1403 = vmatpush1.bf16.msra.mxu0 0
    %1404 = vmatprep.subr.bf16.mxu0 0
    %1405 = vmatpush1.bf16.msra.mxu0 0
    %1406 = vmatprep.subr.bf16.mxu0 0
    %1407 = vmatpush1.bf16.msra.mxu0 %v221
    %1408 = vmatprep.subr.bf16.mxu0 0
    %1409 = vmatpush1.bf16.msra.mxu0 %v220
    %1410 = vmatprep.subr.bf16.mxu0 0
    %1411 = vmatpush1.bf16.msra.mxu0 %v219
    %1412 = vmatprep.subr.bf16.mxu0 0
    %1413 = vmatpush1.bf16.msra.mxu0 %v218
    %1414 = vmatprep.subr.bf16.mxu0 0
    %1415 = vmatpush2.bf16.msra.mxu0 0
    %1416 = vmatprep.subr.bf16.mxu0 0
    %1417 = vmatpush2.bf16.msra.mxu0 0
    %1418 = vmatprep.subr.bf16.mxu0 0
    %1419 = vmatpush2.bf16.msra.mxu0 0
    %1420 = vmatprep.subr.bf16.mxu0 0
    %1421 = vmatpush2.bf16.msra.mxu0 0
    %1422 = vmatprep.subr.bf16.mxu0 0
    %1423 = vmatpush2.bf16.msra.mxu0 0
    %1424 = vmatprep.subr.bf16.mxu0 0
    %1425 = vmatpush2.bf16.msra.mxu0 0
    %1426 = vmatprep.subr.bf16.mxu0 0
    %1427 = vmatpush2.bf16.msra.mxu0 0
    %1428 = vmatprep.subr.bf16.mxu0 0
    %1429 = vmatpush2.bf16.msra.mxu0 0
    %1430 = vmatprep.mubr.bf16.mxu0 0
    %1431 = vmatmul.mubr.bf16.gmra.mxu0 %v1355
    %v1432 = vpop.f32.mrf.mxu0
    %v1433 = vadd.f32 %v1392, %v1432
    %v1434 = vpop.f32.mrf.mxu0
    %v1435 = vpop.f32.mrf.mxu0
    %v1436 = vadd.f32 %v1395, %v1435
    %v1437 = vpop.f32.mrf.mxu0
    %1438 = vdwg.mxu0
    %v1439 = vmax.f32 %v1342, %v1433
    %v1440 = vmax.f32 %v1343, %v1436
    %v1441 = vld [vmem:[%s2] sm:$0x1]
    %v1443 = vlaneseq
    %v1444 = vshrl.u32 %v1443, 7
    %v1445 = vsub.s32 0, %v1444
    %v1446 = vrot.slane %v1441, %v1445
    %v1448 = vadd.f32 %v1439, %v1446
    %v1449 = vadd.f32 %v1440, %v1446
    %v1450 = vmax.f32 %v1448, 0.0
    %v1451 = vmax.f32 %v1449, 0.0
    %v1452 = vpack.c.bf16 %v1451, %v1450
    %v1453 = vld [vmem:[#allocation7] sm:$0xff]
    %v1454 = vld [vmem:[#allocation7 + $0x8] sm:$0xff]
    %v1455 = vld [vmem:[#allocation7 + $0x10] sm:$0xff]
    %v1456 = vld [vmem:[#allocation7 + $0x18] sm:$0xff]
    %v1457 = vld [vmem:[#allocation7 + $0x20] sm:$0xff]
    %v1458 = vld [vmem:[#allocation7 + $0x28] sm:$0xff]
    %v1459 = vld [vmem:[#allocation7 + $0x30] sm:$0xff]
    %v1460 = vld [vmem:[#allocation7 + $0x38] sm:$0xff]
    %v1461 = vld [vmem:[#allocation7 + $0x40] sm:$0xff]
    %v1462 = vld [vmem:[#allocation7 + $0x48] sm:$0xff]
    %v1463 = vld [vmem:[#allocation7 + $0x50] sm:$0xff]
    %v1464 = vld [vmem:[#allocation7 + $0x58] sm:$0xff]
    %v1465 = vld [vmem:[#allocation7 + $0x60] sm:$0xff]
    %v1466 = vld [vmem:[#allocation7 + $0x68] sm:$0xff]
    %v1467 = vld [vmem:[#allocation7 + $0x70] sm:$0xff]
    %v1468 = vld [vmem:[#allocation7 + $0x78] sm:$0xff]
    %v1469 = vld [vmem:[%s4] sm:$0x3]
    %v1471 = vlaneseq
    %v1472 = vshrl.u32 %v1471, 7
    %v1473 = vsub.s32 0, %v1472
    %v1474 = vrot.slane %v1469, %v1473
    %v1475 = vlaneseq
    %v1476 = vshrl.u32 %v1475, 7
    %v1477 = vsub.s32 1, %v1476
    %v1478 = vrot.slane %v1469, %v1477
    %v1497 = vunpack.c.l.b16 %v1453
    %v1498 = vunpack.c.h.b16 %v1453
    %v1499 = vunpack.c.l.b16 %v1454
    %v1500 = vunpack.c.h.b16 %v1454
    %v1501 = vunpack.c.l.b16 %v1455
    %v1502 = vunpack.c.h.b16 %v1455
    %v1503 = vunpack.c.l.b16 %v1456
    %v1504 = vunpack.c.h.b16 %v1456
    %v1505 = vunpack.c.l.b16 %v1457
    %v1506 = vunpack.c.h.b16 %v1457
    %v1507 = vunpack.c.l.b16 %v1458
    %v1508 = vunpack.c.h.b16 %v1458
    %v1509 = vunpack.c.l.b16 %v1459
    %v1510 = vunpack.c.h.b16 %v1459
    %v1511 = vunpack.c.l.b16 %v1460
    %v1512 = vunpack.c.h.b16 %v1460
    %v1513 = vunpack.c.l.b16 %v1461
    %v1514 = vunpack.c.h.b16 %v1461
    %v1515 = vunpack.c.l.b16 %v1462
    %v1516 = vunpack.c.h.b16 %v1462
    %v1517 = vunpack.c.l.b16 %v1463
    %v1518 = vunpack.c.h.b16 %v1463
    %v1519 = vunpack.c.l.b16 %v1464
    %v1520 = vunpack.c.h.b16 %v1464
    %v1521 = vunpack.c.l.b16 %v1465
    %v1522 = vunpack.c.h.b16 %v1465
    %v1523 = vunpack.c.l.b16 %v1466
    %v1524 = vunpack.c.h.b16 %v1466
    %v1525 = vunpack.c.l.b16 %v1467
    %v1526 = vunpack.c.h.b16 %v1467
    %v1527 = vunpack.c.l.b16 %v1468
    %v1528 = vunpack.c.h.b16 %v1468
    %v1529 = vpack.c.b16 %v1499, %v1497
    %v1530 = vpack.c.b16 %v1500, %v1498
    %v1531 = vpack.c.b16 %v1503, %v1501
    %v1532 = vpack.c.b16 %v1504, %v1502
    %v1533 = vpack.c.b16 %v1507, %v1505
    %v1534 = vpack.c.b16 %v1508, %v1506
    %v1535 = vpack.c.b16 %v1511, %v1509
    %v1536 = vpack.c.b16 %v1512, %v1510
    %v1537 = vpack.c.b16 %v1515, %v1513
    %v1538 = vpack.c.b16 %v1516, %v1514
    %v1539 = vpack.c.b16 %v1519, %v1517
    %v1540 = vpack.c.b16 %v1520, %v1518
    %v1541 = vpack.c.b16 %v1523, %v1521
    %v1542 = vpack.c.b16 %v1524, %v1522
    %v1543 = vpack.c.b16 %v1527, %v1525
    %v1544 = vpack.c.b16 %v1528, %v1526
    %1561 = vmatprep.subr.bf16.mxu0 %v1544
    %1562 = vmatpush1.bf16.msra.mxu0 %v1543
    %1563 = vmatprep.subr.bf16.mxu0 %v1542
    %1564 = vmatpush1.bf16.msra.mxu0 %v1541
    %1565 = vmatprep.subr.bf16.mxu0 %v1540
    %1566 = vmatpush1.bf16.msra.mxu0 %v1539
    %1567 = vmatprep.subr.bf16.mxu0 %v1538
    %1568 = vmatpush1.bf16.msra.mxu0 %v1537
    %1569 = vmatprep.subr.bf16.mxu0 %v1536
    %1570 = vmatpush1.bf16.msra.mxu0 %v1535
    %1571 = vmatprep.subr.bf16.mxu0 %v1534
    %1572 = vmatpush1.bf16.msra.mxu0 %v1533
    %1573 = vmatprep.subr.bf16.mxu0 %v1532
    %1574 = vmatpush1.bf16.msra.mxu0 %v1531
    %1575 = vmatprep.subr.bf16.mxu0 %v1530
    %1576 = vmatpush1.bf16.msra.mxu0 %v1529
    %1577 = vmatprep.subr.bf16.mxu0 0
    %1578 = vmatpush2.bf16.msra.mxu0 0
    %1579 = vmatprep.subr.bf16.mxu0 0
    %1580 = vmatpush2.bf16.msra.mxu0 0
    %1581 = vmatprep.subr.bf16.mxu0 0
    %1582 = vmatpush2.bf16.msra.mxu0 0
    %1583 = vmatprep.subr.bf16.mxu0 0
    %1584 = vmatpush2.bf16.msra.mxu0 0
    %1585 = vmatprep.subr.bf16.mxu0 0
    %1586 = vmatpush2.bf16.msra.mxu0 0
    %1587 = vmatprep.subr.bf16.mxu0 0
    %1588 = vmatpush2.bf16.msra.mxu0 0
    %1589 = vmatprep.subr.bf16.mxu0 0
    %1590 = vmatpush2.bf16.msra.mxu0 0
    %1591 = vmatprep.subr.bf16.mxu0 0
    %1592 = vmatpush2.bf16.msra.mxu0 0
    %1593 = vmatprep.mubr.bf16.mxu0 0
    %1594 = vmatmul.mubr.bf16.gmra.mxu0 %v1452
    %v1595 = vpop.f32.mrf.mxu0
    %v1596 = vadd.f32 %v1474, %v1595
    %v1597 = vpop.f32.mrf.mxu0
    %v1598 = vadd.f32 %v1478, %v1597
    %v1599 = vpop.f32.mrf.mxu0
    %v1600 = vadd.f32 %v1474, %v1599
    %v1601 = vpop.f32.mrf.mxu0
    %v1602 = vadd.f32 %v1478, %v1601
    %1603 = vdwg.mxu0
    %v1604 = vmax.f32 %v1596, 0.0
    %v1605 = vmax.f32 %v1600, 0.0
    %v1606 = vxor.u32 %v1598, 2147483648
    %v1607 = vxor.u32 %v1602, 2147483648
    %v1608 = vmul.f32 %v1606, 1.442695
    %v1609 = vpow.pop %v1608
    %v1610 = vmul.f32 %v1607, 1.442695
    %v1611 = vpow.pop %v1610
    %v1612 = vadd.f32 %v1609, 1.0
    %v1613 = vadd.f32 %v1611, 1.0
    %v1614 = vrcp.pop %v1612
    %v1615 = vmul.f32 1.0, %v1614
    %v1616 = vrcp.pop %v1613
    %v1617 = vmul.f32 1.0, %v1616
    %v1618 = vmul.f32 %v1615, %v1604
    %v1619 = vmul.f32 %v1617, %v1605
    %v1620 = vsub.f32 1.0, %v1615
    %v1621 = vsub.f32 1.0, %v1617
    %v1622 = vmul.f32 %v1620, %v1450
    %v1623 = vmul.f32 %v1621, %v1451
    %v1624 = vadd.f32 %v1618, %v1622
    %v1625 = vadd.f32 %v1619, %v1623
    %v1626 = vpack.c.bf16 %v1625, %v1624
    %v1628 = vunpack.c.l.b16 %v1626
    %v1629 = vunpack.c.h.b16 %v1626
    %v1630 = vpack.c.b16 %v1628, %v1628
    %v1631 = vpack.c.b16 %v1629, %v1629
    %1634 = vst [vmem:[#allocation8] sm:$0xf] %v1630
    %1635 = vst [vmem:[#allocation8 + $0x4] sm:$0xf] %v1631
    // Predicated region
    $region34: #{tpu_custom_call.1} parent=1 // pred_check
      _
    $region35: #{tpu_custom_call.1} parent=1 // pred_check_branch
      %1637 = sbr.rel (0) target = $region37
    $region36: #{tpu_custom_call.1} parent=1 // pred_region
      %s1639 = ssub.s32 128, 128
      %1640 = vsyncadd [#allocation4], %s1639
      %s1641 = sshll.u32 [#allocation8], 4
      %s1642 = int_to_ptr.vmem [resolvable:$true] %s1641
      %1647 = dma.vmem_to_hbm [thread:$0]  %s1642, 128, %s5, [#allocation4], 64, 64, 4
    $region37: #{tpu_custom_call.1} parent=1 // pred_fallthru
      _
    // Predicated region
    $region38: #{tpu_custom_call.1} parent=1 // pred_check
      _
    $region39: #{tpu_custom_call.1} parent=1 // pred_check_branch
      %1649 = sbr.rel (0) target = $region41
    $region40: #{tpu_custom_call.1} parent=1 // pred_region
      %1650 = dma.done [#allocation4], 128
    $region41: #{tpu_custom_call.1} parent=1 // pred_fallthru
      _
    %1651 = vsyncpa [#allocation3], 1
    %1652 = vsyncpa [#allocation6], 1
    %1653 = vsyncpa [#allocation4], 1

</llo_original>
